<compile_context>
chip_gen: v6e
topology: v6e:2x2x1
jax: 0.10.0
libtpu: 0.0.40
codegen_flags: <defaults>
</compile_context>

<pallas_src>
import functools

import jax
import jax.numpy as jnp
from jax import lax
from jax.experimental import pallas as pl
from jax.experimental.pallas import tpu as pltpu


# ----------------------------------------------------------------------------
# Fused kernel
# ----------------------------------------------------------------------------
def _fused_prefix_lstm_kernel(x_ref,
                              wih1_ref, whh1_ref, b1_ref,
                              wih2_ref, whh2_ref, b2_ref,
                              mw1_ref, mb1_ref, mw2_ref, mb2_ref,
                              out_ref, *, Hc, L, Bb):
    # x_ref  : (L*Bb, H)   bf16, time-major rows (row = t*Bb + b)
    # wih*   : (Din, 8*Hc) bf16 packed input->gate weights (both directions)
    # whh*   : (2*Hc, 8*Hc) bf16 block-diagonal recurrent weights
    # b*     : (1, 8*Hc)   f32 packed combined biases
    # mw1    : (H, H) bf16, mb1 (1, H) f32, mw2 (H, cloze*H) bf16, mb2 (1, cloze*H) f32
    # out_ref: (Bb, cloze*H) f32  -- lane-dense MLP prefix only
    G = 8 * Hc  # packed gate width (4 gates x 2 directions)

    # Lane mask selecting the forward-direction half of every 2*Hc gate block.
    lane = lax.broadcasted_iota(jnp.int32, (Bb, G), 1)
    fwd_lane = (lane % (2 * Hc)) < Hc

    def run_bidir_layer(x_cat_bf16, wih_ref, whh_ref, bias_ref):
        # One lane-dense matmul for ALL time steps' input->gate contributions
        # (off the serial recurrence chain).  f32 accumulation.
        xg = jnp.dot(x_cat_bf16, wih_ref[...],
                     preferred_element_type=jnp.float32) + bias_ref[...]   # (L*Bb, G)
        whh = whh_ref[...]                                                 # (2*Hc, G) bf16

        h = jnp.zeros((Bb, 2 * Hc), jnp.float32)   # [h_fwd | h_bwd]
        c = jnp.zeros((Bb, 2 * Hc), jnp.float32)   # [c_fwd | c_bwd]
        hs = []
        for s in range(L):                          # fully unrolled (L static & small)
            tf = s            # forward direction consumes time tf
            tb = L - 1 - s    # backward direction consumes time tb
            xg_f = xg[tf * Bb:(tf + 1) * Bb, :]
            xg_b = xg[tb * Bb:(tb + 1) * Bb, :]
            xg_step = jnp.where(fwd_lane, xg_f, xg_b)                       # (Bb, G)
            pre = xg_step + jnp.dot(h.astype(jnp.bfloat16), whh,
                                    preferred_element_type=jnp.float32)     # (Bb, G)
            # PyTorch gate order i,f,g,o; each slice holds [fwd | bwd] lanes.
            i_g = jax.nn.sigmoid(pre[:, 0 * 2 * Hc:1 * 2 * Hc])
            f_g = jax.nn.sigmoid(pre[:, 1 * 2 * Hc:2 * 2 * Hc])
            g_g = jnp.tanh(pre[:, 2 * 2 * Hc:3 * 2 * Hc])
            o_g = jax.nn.sigmoid(pre[:, 3 * 2 * Hc:4 * 2 * Hc])
            c = f_g * c + i_g * g_g
            h = o_g * jnp.tanh(c)
            hs.append(h)      # lanes: [fwd @ time s | bwd @ time L-1-s]
        return hs

    # ---- layer 1 ----
    hs1 = run_bidir_layer(x_ref[...], wih1_ref, whh1_ref, b1_ref)

    # Re-pair directions by time step for layer 2's input (time-major rows).
    fwd_cat = jnp.concatenate([hs1[t][:, :Hc] for t in range(L)], axis=0)          # (L*Bb, Hc)
    bwd_cat = jnp.concatenate([hs1[L - 1 - t][:, Hc:] for t in range(L)], axis=0)  # (L*Bb, Hc)
    y1 = jnp.concatenate([fwd_cat, bwd_cat], axis=1).astype(jnp.bfloat16)          # (L*Bb, 2Hc)

    # ---- layer 2 ----
    hs2 = run_bidir_layer(y1, wih2_ref, whh2_ref, b2_ref)

    # Max-pool over time: max_t [fwd(t)|bwd(t)] == max_s [fwd(s)|bwd(L-1-s)],
    # so the raw per-step states can be pooled without re-pairing.
    pooled = hs2[0]
    for s in range(1, L):
        pooled = jnp.maximum(pooled, hs2[s])                                       # (Bb, H)

    # MLP head: Linear -> ReLU -> Linear  (lane-dense (Bb, cloze*H) output).
    hmid = jnp.dot(pooled.astype(jnp.bfloat16), mw1_ref[...],
                   preferred_element_type=jnp.float32) + mb1_ref[...]
    hmid = jnp.maximum(hmid, 0.0)
    y = jnp.dot(hmid.astype(jnp.bfloat16), mw2_ref[...],
                preferred_element_type=jnp.float32) + mb2_ref[...]                 # (Bb, cloze*H)

    out_ref[...] = y.astype(out_ref.dtype)


# ----------------------------------------------------------------------------
# Parameter packing (done ONCE, outside the forward path)
# ----------------------------------------------------------------------------
def _pack_bidir_layer(p, Hc):
    """Pack one bidirectional LSTM layer.

    Column layout of the packed gate axis (width 8*Hc), gate-major /
    direction-minor:  [i_f i_b | f_f f_b | g_f g_b | o_f o_b].
    """
    def gate_cols(w):  # (4*Hc, Din) -> list of 4 (Din, Hc)
        wt = w.T
        return [wt[:, g * Hc:(g + 1) * Hc] for g in range(4)]

    wihf, wihb = gate_cols(p["w_ih_f"]), gate_cols(p["w_ih_b"])
    whhf, whhb = gate_cols(p["w_hh_f"]), gate_cols(p["w_hh_b"])
    bf = p["b_ih_f"] + p["b_hh_f"]
    bb = p["b_ih_b"] + p["b_hh_b"]
    bfg = [bf[g * Hc:(g + 1) * Hc] for g in range(4)]
    bbg = [bb[g * Hc:(g + 1) * Hc] for g in range(4)]

    wih_packed = jnp.concatenate(
        [m for g in range(4) for m in (wihf[g], wihb[g])], axis=1)        # (Din, 8*Hc)

    # Block-diagonal recurrent weight: rows [h_fwd | h_bwd] -> packed gate cols.
    whh_blk = jnp.zeros((2 * Hc, 8 * Hc), jnp.float32)
    for g in range(4):
        whh_blk = whh_blk.at[0:Hc, g * 2 * Hc:g * 2 * Hc + Hc].set(whhf[g])
        whh_blk = whh_blk.at[Hc:2 * Hc, g * 2 * Hc + Hc:(g + 1) * 2 * Hc].set(whhb[g])

    bias_packed = jnp.concatenate(
        [v for g in range(4) for v in (bfg[g], bbg[g])]).reshape(1, -1)   # (1, 8*Hc)

    # bf16 MXU operands (weights cast once here); biases stay f32 (added post-matmul).
    return (wih_packed.astype(jnp.bfloat16),
            whh_blk.astype(jnp.bfloat16),
            bias_packed.astype(jnp.float32))


def pack_params(params, hidden_size):
    assert hidden_size % 2 == 0, "bidirectional LSTM needs an even hidden size"
    Hc = hidden_size // 2
    # Lane-density guard (review): packed gate width must fill whole 128-lane vregs.
    assert (8 * Hc) % 128 == 0, "packed gate width 8*(H//2) must be a multiple of 128"
    return dict(
        lstm=[_pack_bidir_layer(params["lstm"][layer], Hc) for layer in range(2)],
        w1t=params["mlp_w1"].T.astype(jnp.bfloat16),
        b1=params["mlp_b1"].reshape(1, -1).astype(jnp.float32),
        w2t=params["mlp_w2"].T.astype(jnp.bfloat16),
        b2=params["mlp_b2"].reshape(1, -1).astype(jnp.float32),
    )


# ----------------------------------------------------------------------------
# Forward wrapper: a single pallas_call + wrapper-side layout plumbing
# ----------------------------------------------------------------------------
def prompt_encoder_prefix_lstm_forward(embeddings, packed, cloze_length, *,
                                       batch_block=None):
    """embeddings: (B, S, H) f32  ->  (B, S, H) f32"""
    B, S, H = embeddings.shape
    Hc = H // 2
    L = S - cloze_length
    assert 1 <= L <= 64, "recurrence is fully unrolled; keep the LSTM length small"
    Bb = B if batch_block is None else batch_block
    assert B % Bb == 0, "batch_block must divide the batch"
    nb = B // Bb

    (wih1, whh1, bl1), (wih2, whh2, bl2) = packed["lstm"]

    # Layout plumbing belongs in the wrapper: block-major / time-major / batch-minor
    # rows so per-step slices in the kernel are contiguous row blocks and the whole
    # layer-1 input->gate contribution is one matmul.  Cast to bf16 once here.
    x = embeddings[:, cloze_length:, :].astype(jnp.float32)                 # (B, L, H)
    x_tm = (x.reshape(nb, Bb, L, H).transpose(0, 2, 1, 3)
             .reshape(nb * L * Bb, H).astype(jnp.bfloat16))                 # (nb*L*Bb, H)

    kernel = functools.partial(_fused_prefix_lstm_kernel, Hc=Hc, L=L, Bb=Bb)

    def resident(a):  # weights: full block, constant index_map -> stay in VMEM
        return pl.BlockSpec(a.shape, lambda i, _nd=a.ndim: (0,) * _nd)

    y = pl.pallas_call(
        kernel,
        out_shape=jax.ShapeDtypeStruct((B, cloze_length * H), jnp.float32),
        grid=(nb,),
        in_specs=[
            pl.BlockSpec((L * Bb, H), lambda i: (i, 0)),                    # x block
            resident(wih1), resident(whh1), resident(bl1),
            resident(wih2), resident(whh2), resident(bl2),
            resident(packed["w1t"]), resident(packed["b1"]),
            resident(packed["w2t"]), resident(packed["b2"]),
        ],
        out_specs=pl.BlockSpec((Bb, cloze_length * H), lambda i: (i, 0)),   # lane-dense
        compiler_params=pltpu.CompilerParams(
            dimension_semantics=("parallel",),      # batch axis -> both v7x TensorCores
            vmem_limit_bytes=32 * 1024 * 1024),
    )(x_tm, wih1, whh1, bl1, wih2, whh2, bl2,
      packed["w1t"], packed["b1"], packed["w2t"], packed["b2"])

    # x-passthrough handled outside the kernel (no HBM roundtrip of unchanged rows):
    prefix = y.reshape(B, cloze_length, H)
    return lax.dynamic_update_slice(embeddings.astype(jnp.float32), prefix, (0, 0, 0))


# ----------------------------------------------------------------------------
# Pure-JAX reference (same math, f32, no Pallas) for validation
# ----------------------------------------------------------------------------
def _reference_forward(embeddings, params, cloze_length):
    B, S, H = embeddings.shape
    Hc = H // 2
    x = embeddings[:, cloze_length:, :].astype(jnp.float32)
    L = S - cloze_length

    def run_dir(inp, w_ih, w_hh, b_ih, b_hh, reverse):
        seq = inp[:, ::-1, :] if reverse else inp
        h = jnp.zeros((B, Hc), jnp.float32)
        c = jnp.zeros((B, Hc), jnp.float32)
        outs = []
        for t in range(L):
            pre = seq[:, t, :] @ w_ih.T + h @ w_hh.T + b_ih + b_hh
            i = jax.nn.sigmoid(pre[:, 0 * Hc:1 * Hc])
            f = jax.nn.sigmoid(pre[:, 1 * Hc:2 * Hc])
            g = jnp.tanh(pre[:, 2 * Hc:3 * Hc])
            o = jax.nn.sigmoid(pre[:, 3 * Hc:4 * Hc])
            c = f * c + i * g
            h = o * jnp.tanh(c)
            outs.append(h)
        out = jnp.stack(outs, axis=1)
        return out[:, ::-1, :] if reverse else out

    layer_in = x
    for layer in range(2):
        p = params["lstm"][layer]
        f = run_dir(layer_in, p["w_ih_f"], p["w_hh_f"], p["b_ih_f"], p["b_hh_f"], False)
        b = run_dir(layer_in, p["w_ih_b"], p["w_hh_b"], p["b_ih_b"], p["b_hh_b"], True)
        layer_in = jnp.concatenate([f, b], axis=-1)

    pooled = jnp.max(layer_in, axis=1)
    h = jnp.maximum(pooled @ params["mlp_w1"].T + params["mlp_b1"], 0.0)
    y = h @ params["mlp_w2"].T + params["mlp_b2"]
    return jnp.concatenate([y.reshape(B, cloze_length, H), x], axis=1)


# ----------------------------------------------------------------------------
# Deterministic parameter construction (PyTorch module shapes)
# ----------------------------------------------------------------------------
def make_params(key, hidden_size, cloze_length):
    Hc = hidden_size // 2
    keys = iter(jax.random.split(key, 32))

    def uni(shape, scale):
        return jax.random.uniform(next(keys), shape, jnp.float32, -scale, scale)

    lstm = []
    for layer in range(2):
        d_in = hidden_size if layer == 0 else 2 * Hc  # both equal hidden_size here
        s = 1.0 / (Hc ** 0.5)
        lstm.append(dict(
            w_ih_f=uni((4 * Hc, d_in), s), w_hh_f=uni((4 * Hc, Hc), s),
            b_ih_f=uni((4 * Hc,), s),      b_hh_f=uni((4 * Hc,), s),
            w_ih_b=uni((4 * Hc, d_in), s), w_hh_b=uni((4 * Hc, Hc), s),
            b_ih_b=uni((4 * Hc,), s),      b_hh_b=uni((4 * Hc,), s),
        ))

    s1 = 1.0 / (hidden_size ** 0.5)
    return dict(
        lstm=lstm,
        mlp_w1=uni((hidden_size, hidden_size), s1),
        mlp_b1=uni((hidden_size,), s1),
        mlp_w2=uni((cloze_length * hidden_size, hidden_size), s1),
        mlp_b2=uni((cloze_length * hidden_size,), s1),
    )


# ----------------------------------------------------------------------------
if __name__ == "__main__":
    B, SEQ, H = 2, 12, 32
    CLOZE = 4  # args.model.adapter.prefix_len

    key = jax.random.PRNGKey(0)
    k_emb, k_par = jax.random.split(key)
    embeddings = jax.random.normal(k_emb, (B, SEQ, H), jnp.float32)
    params = make_params(k_par, H, CLOZE)

    packed = pack_params(params, H)                       # one-time packing (bf16 weights)
    packed = jax.tree_util.tree_map(jax.block_until_ready, packed)

    out = prompt_encoder_prefix_lstm_forward(embeddings, packed, CLOZE)
    out = jax.block_until_ready(out)

    ref = _reference_forward(embeddings, params, CLOZE)
    assert out.shape == (B, SEQ, H), out.shape
    # bf16 MXU operands (per perf review) -> tolerance loosened vs the f32 kernel.
    assert jnp.allclose(out, ref, atol=5e-2, rtol=5e-2), "mismatch vs reference"
    # Passthrough rows are handled outside the kernel and must match exactly.
    assert jnp.array_equal(out[:, CLOZE:, :], embeddings[:, CLOZE:, :])

    print("KERNEL_OK")
</pallas_src>

<mosaic_0001>
module attributes {stable_mosaic.version = 11 : i64} {
  func.func @_fused_prefix_lstm_kernel(%arg0: i32, %arg1: memref<16x32xbf16, #tpu.memory_space<vmem>>, %arg2: memref<32x128xbf16, #tpu.memory_space<vmem>>, %arg3: memref<32x128xbf16, #tpu.memory_space<vmem>>, %arg4: memref<1x128xf32, #tpu.memory_space<vmem>>, %arg5: memref<32x128xbf16, #tpu.memory_space<vmem>>, %arg6: memref<32x128xbf16, #tpu.memory_space<vmem>>, %arg7: memref<1x128xf32, #tpu.memory_space<vmem>>, %arg8: memref<32x32xbf16, #tpu.memory_space<vmem>>, %arg9: memref<1x32xf32, #tpu.memory_space<vmem>>, %arg10: memref<32x128xbf16, #tpu.memory_space<vmem>>, %arg11: memref<1x128xf32, #tpu.memory_space<vmem>>, %arg12: memref<2x128xf32, #tpu.memory_space<vmem>>) attributes {dimension_semantics = [#tpu.dimension_semantics<parallel>], iteration_bounds = array<i64: 1>, scalar_prefetch = 0 : i64, scratch_operands = 0 : i64, tpu.core_type = #tpu.core_type<tc>, window_params = [{transform_indices = @transform_0, window_bounds = array<i64: 16, 32>}, {pipeline_mode = #tpu.pipeline_mode<synchronous>, transform_indices = @transform_1, window_bounds = array<i64: 32, 128>}, {pipeline_mode = #tpu.pipeline_mode<synchronous>, transform_indices = @transform_2, window_bounds = array<i64: 32, 128>}, {pipeline_mode = #tpu.pipeline_mode<synchronous>, transform_indices = @transform_3, window_bounds = array<i64: 1, 128>}, {pipeline_mode = #tpu.pipeline_mode<synchronous>, transform_indices = @transform_4, window_bounds = array<i64: 32, 128>}, {pipeline_mode = #tpu.pipeline_mode<synchronous>, transform_indices = @transform_5, window_bounds = array<i64: 32, 128>}, {pipeline_mode = #tpu.pipeline_mode<synchronous>, transform_indices = @transform_6, window_bounds = array<i64: 1, 128>}, {pipeline_mode = #tpu.pipeline_mode<synchronous>, transform_indices = @transform_7, window_bounds = array<i64: 32, 32>}, {pipeline_mode = #tpu.pipeline_mode<synchronous>, transform_indices = @transform_8, window_bounds = array<i64: 1, 32>}, {pipeline_mode = #tpu.pipeline_mode<synchronous>, transform_indices = @transform_9, window_bounds = array<i64: 32, 128>}, {pipeline_mode = #tpu.pipeline_mode<synchronous>, transform_indices = @transform_10, window_bounds = array<i64: 1, 128>}, {transform_indices = @transform_11, window_bounds = array<i64: 2, 128>}]} {
    %0 = tpu.iota {dimensions = array<i32: 1>} : vector<2x128xi32>
    %c32_i32 = arith.constant 32 : i32
    %c0_i32 = arith.constant 0 : i32
    %1 = arith.cmpi eq, %c32_i32, %c0_i32 : i32
    %c1_i32 = arith.constant 1 : i32
    %2 = arith.select %1, %c1_i32, %c32_i32 : i32
    %3 = vector.broadcast %2 : i32 to vector<2x128xi32>
    %4 = arith.remsi %0, %3 : vector<2x128xi32>
    %c0_i32_0 = arith.constant 0 : i32
    %5 = vector.broadcast %c0_i32_0 : i32 to vector<2x128xi32>
    %6 = arith.cmpi ne, %4, %5 : vector<2x128xi32>
    %c0_i32_1 = arith.constant 0 : i32
    %7 = vector.broadcast %c0_i32_1 : i32 to vector<2x128xi32>
    %8 = arith.cmpi slt, %4, %7 : vector<2x128xi32>
    %c0_i32_2 = arith.constant 0 : i32
    %9 = arith.cmpi slt, %2, %c0_i32_2 : i32
    %10 = vector.broadcast %9 : i1 to vector<2x128xi1>
    %11 = vector.broadcast %10 : vector<2x128xi1> to vector<2x128xi1>
    %12 = arith.xori %8, %11 : vector<2x128xi1>
    %13 = arith.andi %12, %6 : vector<2x128xi1>
    %14 = vector.broadcast %2 : i32 to vector<2x128xi32>
    %15 = arith.addi %4, %14 : vector<2x128xi32>
    %16 = arith.select %13, %15, %4 : vector<2x128xi1>, vector<2x128xi32>
    %c16_i32 = arith.constant 16 : i32
    %17 = vector.broadcast %c16_i32 : i32 to vector<2x128xi32>
    %18 = arith.cmpi slt, %16, %17 : vector<2x128xi32>
    %c0 = arith.constant 0 : index
    %c0_3 = arith.constant 0 : index
    %19 = vector.load %arg1[%c0, %c0_3] : memref<16x32xbf16, #tpu.memory_space<vmem>>, vector<16x32xbf16>
    %c0_4 = arith.constant 0 : index
    %c0_5 = arith.constant 0 : index
    %20 = vector.load %arg2[%c0_4, %c0_5] : memref<32x128xbf16, #tpu.memory_space<vmem>>, vector<32x128xbf16>
    %cst = arith.constant dense<0.000000e+00> : vector<16x128xf32>
    %21 = tpu.matmul %19, %20, %cst {dimension_numbers = #tpu.dot_dimension_numbers<[1], [0], [0], [1], [0, 0, 1, 1], [], []>} : vector<16x32xbf16>, vector<32x128xbf16>, vector<16x128xf32> -> vector<16x128xf32>
    %c0_6 = arith.constant 0 : index
    %c0_7 = arith.constant 0 : index
    %22 = vector.load %arg4[%c0_6, %c0_7] : memref<1x128xf32, #tpu.memory_space<vmem>>, vector<1x128xf32>
    %23 = vector.broadcast %22 : vector<1x128xf32> to vector<16x128xf32>
    %24 = arith.addf %21, %23 : vector<16x128xf32>
    %c0_8 = arith.constant 0 : index
    %c0_9 = arith.constant 0 : index
    %25 = vector.load %arg3[%c0_8, %c0_9] : memref<32x128xbf16, #tpu.memory_space<vmem>>, vector<32x128xbf16>
    %cst_10 = arith.constant 0.000000e+00 : f32
    %26 = vector.broadcast %cst_10 : f32 to vector<2x32xf32>
    %cst_11 = arith.constant 0.000000e+00 : f32
    %27 = vector.broadcast %cst_11 : f32 to vector<2x32xf32>
    %28 = vector.extract_strided_slice %24 {offsets = [0, 0], sizes = [2, 128], strides = [1, 1]} : vector<16x128xf32> to vector<2x128xf32>
    %29 = vector.extract_strided_slice %24 {offsets = [14, 0], sizes = [2, 128], strides = [1, 1]} : vector<16x128xf32> to vector<2x128xf32>
    %30 = arith.select %18, %28, %29 : vector<2x128xi1>, vector<2x128xf32>
    %31 = arith.truncf %26 : vector<2x32xf32> to vector<2x32xbf16>
    %cst_12 = arith.constant dense<0.000000e+00> : vector<2x128xf32>
    %32 = tpu.matmul %31, %25, %cst_12 {dimension_numbers = #tpu.dot_dimension_numbers<[1], [0], [0], [1], [0, 0, 1, 1], [], []>} : vector<2x32xbf16>, vector<32x128xbf16>, vector<2x128xf32> -> vector<2x128xf32>
    %33 = arith.addf %30, %32 : vector<2x128xf32>
    %34 = vector.extract_strided_slice %33 {offsets = [0, 0], sizes = [2, 32], strides = [1, 1]} : vector<2x128xf32> to vector<2x32xf32>
    %35 = arith.negf %34 : vector<2x32xf32>
    %36 = math.exp %35 : vector<2x32xf32>
    %cst_13 = arith.constant 1.000000e+00 : f32
    %37 = vector.broadcast %cst_13 : f32 to vector<2x32xf32>
    %38 = arith.addf %37, %36 : vector<2x32xf32>
    %39 = arith.divf %37, %38 : vector<2x32xf32>
    %40 = vector.extract_strided_slice %33 {offsets = [0, 32], sizes = [2, 32], strides = [1, 1]} : vector<2x128xf32> to vector<2x32xf32>
    %41 = arith.negf %40 : vector<2x32xf32>
    %42 = math.exp %41 : vector<2x32xf32>
    %cst_14 = arith.constant 1.000000e+00 : f32
    %43 = vector.broadcast %cst_14 : f32 to vector<2x32xf32>
    %44 = arith.addf %43, %42 : vector<2x32xf32>
    %45 = arith.divf %43, %44 : vector<2x32xf32>
    %46 = vector.extract_strided_slice %33 {offsets = [0, 64], sizes = [2, 32], strides = [1, 1]} : vector<2x128xf32> to vector<2x32xf32>
    %47 = math.tanh %46 : vector<2x32xf32>
    %48 = vector.extract_strided_slice %33 {offsets = [0, 96], sizes = [2, 32], strides = [1, 1]} : vector<2x128xf32> to vector<2x32xf32>
    %49 = arith.negf %48 : vector<2x32xf32>
    %50 = math.exp %49 : vector<2x32xf32>
    %cst_15 = arith.constant 1.000000e+00 : f32
    %51 = vector.broadcast %cst_15 : f32 to vector<2x32xf32>
    %52 = arith.addf %51, %50 : vector<2x32xf32>
    %53 = arith.divf %51, %52 : vector<2x32xf32>
    %54 = arith.mulf %45, %27 : vector<2x32xf32>
    %55 = arith.mulf %39, %47 : vector<2x32xf32>
    %56 = arith.addf %54, %55 : vector<2x32xf32>
    %57 = math.tanh %56 : vector<2x32xf32>
    %58 = arith.mulf %53, %57 : vector<2x32xf32>
    %59 = vector.extract_strided_slice %24 {offsets = [2, 0], sizes = [2, 128], strides = [1, 1]} : vector<16x128xf32> to vector<2x128xf32>
    %60 = vector.extract_strided_slice %24 {offsets = [12, 0], sizes = [2, 128], strides = [1, 1]} : vector<16x128xf32> to vector<2x128xf32>
    %61 = arith.select %18, %59, %60 : vector<2x128xi1>, vector<2x128xf32>
    %62 = arith.truncf %58 : vector<2x32xf32> to vector<2x32xbf16>
    %cst_16 = arith.constant dense<0.000000e+00> : vector<2x128xf32>
    %63 = tpu.matmul %62, %25, %cst_16 {dimension_numbers = #tpu.dot_dimension_numbers<[1], [0], [0], [1], [0, 0, 1, 1], [], []>} : vector<2x32xbf16>, vector<32x128xbf16>, vector<2x128xf32> -> vector<2x128xf32>
    %64 = arith.addf %61, %63 : vector<2x128xf32>
    %65 = vector.extract_strided_slice %64 {offsets = [0, 0], sizes = [2, 32], strides = [1, 1]} : vector<2x128xf32> to vector<2x32xf32>
    %66 = arith.negf %65 : vector<2x32xf32>
    %67 = math.exp %66 : vector<2x32xf32>
    %cst_17 = arith.constant 1.000000e+00 : f32
    %68 = vector.broadcast %cst_17 : f32 to vector<2x32xf32>
    %69 = arith.addf %68, %67 : vector<2x32xf32>
    %70 = arith.divf %68, %69 : vector<2x32xf32>
    %71 = vector.extract_strided_slice %64 {offsets = [0, 32], sizes = [2, 32], strides = [1, 1]} : vector<2x128xf32> to vector<2x32xf32>
    %72 = arith.negf %71 : vector<2x32xf32>
    %73 = math.exp %72 : vector<2x32xf32>
    %cst_18 = arith.constant 1.000000e+00 : f32
    %74 = vector.broadcast %cst_18 : f32 to vector<2x32xf32>
    %75 = arith.addf %74, %73 : vector<2x32xf32>
    %76 = arith.divf %74, %75 : vector<2x32xf32>
    %77 = vector.extract_strided_slice %64 {offsets = [0, 64], sizes = [2, 32], strides = [1, 1]} : vector<2x128xf32> to vector<2x32xf32>
    %78 = math.tanh %77 : vector<2x32xf32>
    %79 = vector.extract_strided_slice %64 {offsets = [0, 96], sizes = [2, 32], strides = [1, 1]} : vector<2x128xf32> to vector<2x32xf32>
    %80 = arith.negf %79 : vector<2x32xf32>
    %81 = math.exp %80 : vector<2x32xf32>
    %cst_19 = arith.constant 1.000000e+00 : f32
    %82 = vector.broadcast %cst_19 : f32 to vector<2x32xf32>
    %83 = arith.addf %82, %81 : vector<2x32xf32>
    %84 = arith.divf %82, %83 : vector<2x32xf32>
    %85 = arith.mulf %76, %56 : vector<2x32xf32>
    %86 = arith.mulf %70, %78 : vector<2x32xf32>
    %87 = arith.addf %85, %86 : vector<2x32xf32>
    %88 = math.tanh %87 : vector<2x32xf32>
    %89 = arith.mulf %84, %88 : vector<2x32xf32>
    %90 = vector.extract_strided_slice %24 {offsets = [4, 0], sizes = [2, 128], strides = [1, 1]} : vector<16x128xf32> to vector<2x128xf32>
    %91 = vector.extract_strided_slice %24 {offsets = [10, 0], sizes = [2, 128], strides = [1, 1]} : vector<16x128xf32> to vector<2x128xf32>
    %92 = arith.select %18, %90, %91 : vector<2x128xi1>, vector<2x128xf32>
    %93 = arith.truncf %89 : vector<2x32xf32> to vector<2x32xbf16>
    %cst_20 = arith.constant dense<0.000000e+00> : vector<2x128xf32>
    %94 = tpu.matmul %93, %25, %cst_20 {dimension_numbers = #tpu.dot_dimension_numbers<[1], [0], [0], [1], [0, 0, 1, 1], [], []>} : vector<2x32xbf16>, vector<32x128xbf16>, vector<2x128xf32> -> vector<2x128xf32>
    %95 = arith.addf %92, %94 : vector<2x128xf32>
    %96 = vector.extract_strided_slice %95 {offsets = [0, 0], sizes = [2, 32], strides = [1, 1]} : vector<2x128xf32> to vector<2x32xf32>
    %97 = arith.negf %96 : vector<2x32xf32>
    %98 = math.exp %97 : vector<2x32xf32>
    %cst_21 = arith.constant 1.000000e+00 : f32
    %99 = vector.broadcast %cst_21 : f32 to vector<2x32xf32>
    %100 = arith.addf %99, %98 : vector<2x32xf32>
    %101 = arith.divf %99, %100 : vector<2x32xf32>
    %102 = vector.extract_strided_slice %95 {offsets = [0, 32], sizes = [2, 32], strides = [1, 1]} : vector<2x128xf32> to vector<2x32xf32>
    %103 = arith.negf %102 : vector<2x32xf32>
    %104 = math.exp %103 : vector<2x32xf32>
    %cst_22 = arith.constant 1.000000e+00 : f32
    %105 = vector.broadcast %cst_22 : f32 to vector<2x32xf32>
    %106 = arith.addf %105, %104 : vector<2x32xf32>
    %107 = arith.divf %105, %106 : vector<2x32xf32>
    %108 = vector.extract_strided_slice %95 {offsets = [0, 64], sizes = [2, 32], strides = [1, 1]} : vector<2x128xf32> to vector<2x32xf32>
    %109 = math.tanh %108 : vector<2x32xf32>
    %110 = vector.extract_strided_slice %95 {offsets = [0, 96], sizes = [2, 32], strides = [1, 1]} : vector<2x128xf32> to vector<2x32xf32>
    %111 = arith.negf %110 : vector<2x32xf32>
    %112 = math.exp %111 : vector<2x32xf32>
    %cst_23 = arith.constant 1.000000e+00 : f32
    %113 = vector.broadcast %cst_23 : f32 to vector<2x32xf32>
    %114 = arith.addf %113, %112 : vector<2x32xf32>
    %115 = arith.divf %113, %114 : vector<2x32xf32>
    %116 = arith.mulf %107, %87 : vector<2x32xf32>
    %117 = arith.mulf %101, %109 : vector<2x32xf32>
    %118 = arith.addf %116, %117 : vector<2x32xf32>
    %119 = math.tanh %118 : vector<2x32xf32>
    %120 = arith.mulf %115, %119 : vector<2x32xf32>
    %121 = vector.extract_strided_slice %24 {offsets = [6, 0], sizes = [2, 128], strides = [1, 1]} : vector<16x128xf32> to vector<2x128xf32>
    %122 = vector.extract_strided_slice %24 {offsets = [8, 0], sizes = [2, 128], strides = [1, 1]} : vector<16x128xf32> to vector<2x128xf32>
    %123 = arith.select %18, %121, %122 : vector<2x128xi1>, vector<2x128xf32>
    %124 = arith.truncf %120 : vector<2x32xf32> to vector<2x32xbf16>
    %cst_24 = arith.constant dense<0.000000e+00> : vector<2x128xf32>
    %125 = tpu.matmul %124, %25, %cst_24 {dimension_numbers = #tpu.dot_dimension_numbers<[1], [0], [0], [1], [0, 0, 1, 1], [], []>} : vector<2x32xbf16>, vector<32x128xbf16>, vector<2x128xf32> -> vector<2x128xf32>
    %126 = arith.addf %123, %125 : vector<2x128xf32>
    %127 = vector.extract_strided_slice %126 {offsets = [0, 0], sizes = [2, 32], strides = [1, 1]} : vector<2x128xf32> to vector<2x32xf32>
    %128 = arith.negf %127 : vector<2x32xf32>
    %129 = math.exp %128 : vector<2x32xf32>
    %cst_25 = arith.constant 1.000000e+00 : f32
    %130 = vector.broadcast %cst_25 : f32 to vector<2x32xf32>
    %131 = arith.addf %130, %129 : vector<2x32xf32>
    %132 = arith.divf %130, %131 : vector<2x32xf32>
    %133 = vector.extract_strided_slice %126 {offsets = [0, 32], sizes = [2, 32], strides = [1, 1]} : vector<2x128xf32> to vector<2x32xf32>
    %134 = arith.negf %133 : vector<2x32xf32>
    %135 = math.exp %134 : vector<2x32xf32>
    %cst_26 = arith.constant 1.000000e+00 : f32
    %136 = vector.broadcast %cst_26 : f32 to vector<2x32xf32>
    %137 = arith.addf %136, %135 : vector<2x32xf32>
    %138 = arith.divf %136, %137 : vector<2x32xf32>
    %139 = vector.extract_strided_slice %126 {offsets = [0, 64], sizes = [2, 32], strides = [1, 1]} : vector<2x128xf32> to vector<2x32xf32>
    %140 = math.tanh %139 : vector<2x32xf32>
    %141 = vector.extract_strided_slice %126 {offsets = [0, 96], sizes = [2, 32], strides = [1, 1]} : vector<2x128xf32> to vector<2x32xf32>
    %142 = arith.negf %141 : vector<2x32xf32>
    %143 = math.exp %142 : vector<2x32xf32>
    %cst_27 = arith.constant 1.000000e+00 : f32
    %144 = vector.broadcast %cst_27 : f32 to vector<2x32xf32>
    %145 = arith.addf %144, %143 : vector<2x32xf32>
    %146 = arith.divf %144, %145 : vector<2x32xf32>
    %147 = arith.mulf %138, %118 : vector<2x32xf32>
    %148 = arith.mulf %132, %140 : vector<2x32xf32>
    %149 = arith.addf %147, %148 : vector<2x32xf32>
    %150 = math.tanh %149 : vector<2x32xf32>
    %151 = arith.mulf %146, %150 : vector<2x32xf32>
    %152 = vector.extract_strided_slice %24 {offsets = [8, 0], sizes = [2, 128], strides = [1, 1]} : vector<16x128xf32> to vector<2x128xf32>
    %153 = vector.extract_strided_slice %24 {offsets = [6, 0], sizes = [2, 128], strides = [1, 1]} : vector<16x128xf32> to vector<2x128xf32>
    %154 = arith.select %18, %152, %153 : vector<2x128xi1>, vector<2x128xf32>
    %155 = arith.truncf %151 : vector<2x32xf32> to vector<2x32xbf16>
    %cst_28 = arith.constant dense<0.000000e+00> : vector<2x128xf32>
    %156 = tpu.matmul %155, %25, %cst_28 {dimension_numbers = #tpu.dot_dimension_numbers<[1], [0], [0], [1], [0, 0, 1, 1], [], []>} : vector<2x32xbf16>, vector<32x128xbf16>, vector<2x128xf32> -> vector<2x128xf32>
    %157 = arith.addf %154, %156 : vector<2x128xf32>
    %158 = vector.extract_strided_slice %157 {offsets = [0, 0], sizes = [2, 32], strides = [1, 1]} : vector<2x128xf32> to vector<2x32xf32>
    %159 = arith.negf %158 : vector<2x32xf32>
    %160 = math.exp %159 : vector<2x32xf32>
    %cst_29 = arith.constant 1.000000e+00 : f32
    %161 = vector.broadcast %cst_29 : f32 to vector<2x32xf32>
    %162 = arith.addf %161, %160 : vector<2x32xf32>
    %163 = arith.divf %161, %162 : vector<2x32xf32>
    %164 = vector.extract_strided_slice %157 {offsets = [0, 32], sizes = [2, 32], strides = [1, 1]} : vector<2x128xf32> to vector<2x32xf32>
    %165 = arith.negf %164 : vector<2x32xf32>
    %166 = math.exp %165 : vector<2x32xf32>
    %cst_30 = arith.constant 1.000000e+00 : f32
    %167 = vector.broadcast %cst_30 : f32 to vector<2x32xf32>
    %168 = arith.addf %167, %166 : vector<2x32xf32>
    %169 = arith.divf %167, %168 : vector<2x32xf32>
    %170 = vector.extract_strided_slice %157 {offsets = [0, 64], sizes = [2, 32], strides = [1, 1]} : vector<2x128xf32> to vector<2x32xf32>
    %171 = math.tanh %170 : vector<2x32xf32>
    %172 = vector.extract_strided_slice %157 {offsets = [0, 96], sizes = [2, 32], strides = [1, 1]} : vector<2x128xf32> to vector<2x32xf32>
    %173 = arith.negf %172 : vector<2x32xf32>
    %174 = math.exp %173 : vector<2x32xf32>
    %cst_31 = arith.constant 1.000000e+00 : f32
    %175 = vector.broadcast %cst_31 : f32 to vector<2x32xf32>
    %176 = arith.addf %175, %174 : vector<2x32xf32>
    %177 = arith.divf %175, %176 : vector<2x32xf32>
    %178 = arith.mulf %169, %149 : vector<2x32xf32>
    %179 = arith.mulf %163, %171 : vector<2x32xf32>
    %180 = arith.addf %178, %179 : vector<2x32xf32>
    %181 = math.tanh %180 : vector<2x32xf32>
    %182 = arith.mulf %177, %181 : vector<2x32xf32>
    %183 = vector.extract_strided_slice %24 {offsets = [10, 0], sizes = [2, 128], strides = [1, 1]} : vector<16x128xf32> to vector<2x128xf32>
    %184 = vector.extract_strided_slice %24 {offsets = [4, 0], sizes = [2, 128], strides = [1, 1]} : vector<16x128xf32> to vector<2x128xf32>
    %185 = arith.select %18, %183, %184 : vector<2x128xi1>, vector<2x128xf32>
    %186 = arith.truncf %182 : vector<2x32xf32> to vector<2x32xbf16>
    %cst_32 = arith.constant dense<0.000000e+00> : vector<2x128xf32>
    %187 = tpu.matmul %186, %25, %cst_32 {dimension_numbers = #tpu.dot_dimension_numbers<[1], [0], [0], [1], [0, 0, 1, 1], [], []>} : vector<2x32xbf16>, vector<32x128xbf16>, vector<2x128xf32> -> vector<2x128xf32>
    %188 = arith.addf %185, %187 : vector<2x128xf32>
    %189 = vector.extract_strided_slice %188 {offsets = [0, 0], sizes = [2, 32], strides = [1, 1]} : vector<2x128xf32> to vector<2x32xf32>
    %190 = arith.negf %189 : vector<2x32xf32>
    %191 = math.exp %190 : vector<2x32xf32>
    %cst_33 = arith.constant 1.000000e+00 : f32
    %192 = vector.broadcast %cst_33 : f32 to vector<2x32xf32>
    %193 = arith.addf %192, %191 : vector<2x32xf32>
    %194 = arith.divf %192, %193 : vector<2x32xf32>
    %195 = vector.extract_strided_slice %188 {offsets = [0, 32], sizes = [2, 32], strides = [1, 1]} : vector<2x128xf32> to vector<2x32xf32>
    %196 = arith.negf %195 : vector<2x32xf32>
    %197 = math.exp %196 : vector<2x32xf32>
    %cst_34 = arith.constant 1.000000e+00 : f32
    %198 = vector.broadcast %cst_34 : f32 to vector<2x32xf32>
    %199 = arith.addf %198, %197 : vector<2x32xf32>
    %200 = arith.divf %198, %199 : vector<2x32xf32>
    %201 = vector.extract_strided_slice %188 {offsets = [0, 64], sizes = [2, 32], strides = [1, 1]} : vector<2x128xf32> to vector<2x32xf32>
    %202 = math.tanh %201 : vector<2x32xf32>
    %203 = vector.extract_strided_slice %188 {offsets = [0, 96], sizes = [2, 32], strides = [1, 1]} : vector<2x128xf32> to vector<2x32xf32>
    %204 = arith.negf %203 : vector<2x32xf32>
    %205 = math.exp %204 : vector<2x32xf32>
    %cst_35 = arith.constant 1.000000e+00 : f32
    %206 = vector.broadcast %cst_35 : f32 to vector<2x32xf32>
    %207 = arith.addf %206, %205 : vector<2x32xf32>
    %208 = arith.divf %206, %207 : vector<2x32xf32>
    %209 = arith.mulf %200, %180 : vector<2x32xf32>
    %210 = arith.mulf %194, %202 : vector<2x32xf32>
    %211 = arith.addf %209, %210 : vector<2x32xf32>
    %212 = math.tanh %211 : vector<2x32xf32>
    %213 = arith.mulf %208, %212 : vector<2x32xf32>
    %214 = vector.extract_strided_slice %24 {offsets = [12, 0], sizes = [2, 128], strides = [1, 1]} : vector<16x128xf32> to vector<2x128xf32>
    %215 = vector.extract_strided_slice %24 {offsets = [2, 0], sizes = [2, 128], strides = [1, 1]} : vector<16x128xf32> to vector<2x128xf32>
    %216 = arith.select %18, %214, %215 : vector<2x128xi1>, vector<2x128xf32>
    %217 = arith.truncf %213 : vector<2x32xf32> to vector<2x32xbf16>
    %cst_36 = arith.constant dense<0.000000e+00> : vector<2x128xf32>
    %218 = tpu.matmul %217, %25, %cst_36 {dimension_numbers = #tpu.dot_dimension_numbers<[1], [0], [0], [1], [0, 0, 1, 1], [], []>} : vector<2x32xbf16>, vector<32x128xbf16>, vector<2x128xf32> -> vector<2x128xf32>
    %219 = arith.addf %216, %218 : vector<2x128xf32>
    %220 = vector.extract_strided_slice %219 {offsets = [0, 0], sizes = [2, 32], strides = [1, 1]} : vector<2x128xf32> to vector<2x32xf32>
    %221 = arith.negf %220 : vector<2x32xf32>
    %222 = math.exp %221 : vector<2x32xf32>
    %cst_37 = arith.constant 1.000000e+00 : f32
    %223 = vector.broadcast %cst_37 : f32 to vector<2x32xf32>
    %224 = arith.addf %223, %222 : vector<2x32xf32>
    %225 = arith.divf %223, %224 : vector<2x32xf32>
    %226 = vector.extract_strided_slice %219 {offsets = [0, 32], sizes = [2, 32], strides = [1, 1]} : vector<2x128xf32> to vector<2x32xf32>
    %227 = arith.negf %226 : vector<2x32xf32>
    %228 = math.exp %227 : vector<2x32xf32>
    %cst_38 = arith.constant 1.000000e+00 : f32
    %229 = vector.broadcast %cst_38 : f32 to vector<2x32xf32>
    %230 = arith.addf %229, %228 : vector<2x32xf32>
    %231 = arith.divf %229, %230 : vector<2x32xf32>
    %232 = vector.extract_strided_slice %219 {offsets = [0, 64], sizes = [2, 32], strides = [1, 1]} : vector<2x128xf32> to vector<2x32xf32>
    %233 = math.tanh %232 : vector<2x32xf32>
    %234 = vector.extract_strided_slice %219 {offsets = [0, 96], sizes = [2, 32], strides = [1, 1]} : vector<2x128xf32> to vector<2x32xf32>
    %235 = arith.negf %234 : vector<2x32xf32>
    %236 = math.exp %235 : vector<2x32xf32>
    %cst_39 = arith.constant 1.000000e+00 : f32
    %237 = vector.broadcast %cst_39 : f32 to vector<2x32xf32>
    %238 = arith.addf %237, %236 : vector<2x32xf32>
    %239 = arith.divf %237, %238 : vector<2x32xf32>
    %240 = arith.mulf %231, %211 : vector<2x32xf32>
    %241 = arith.mulf %225, %233 : vector<2x32xf32>
    %242 = arith.addf %240, %241 : vector<2x32xf32>
    %243 = math.tanh %242 : vector<2x32xf32>
    %244 = arith.mulf %239, %243 : vector<2x32xf32>
    %245 = vector.extract_strided_slice %24 {offsets = [14, 0], sizes = [2, 128], strides = [1, 1]} : vector<16x128xf32> to vector<2x128xf32>
    %246 = vector.extract_strided_slice %24 {offsets = [0, 0], sizes = [2, 128], strides = [1, 1]} : vector<16x128xf32> to vector<2x128xf32>
    %247 = arith.select %18, %245, %246 : vector<2x128xi1>, vector<2x128xf32>
    %248 = arith.truncf %244 : vector<2x32xf32> to vector<2x32xbf16>
    %cst_40 = arith.constant dense<0.000000e+00> : vector<2x128xf32>
    %249 = tpu.matmul %248, %25, %cst_40 {dimension_numbers = #tpu.dot_dimension_numbers<[1], [0], [0], [1], [0, 0, 1, 1], [], []>} : vector<2x32xbf16>, vector<32x128xbf16>, vector<2x128xf32> -> vector<2x128xf32>
    %250 = arith.addf %247, %249 : vector<2x128xf32>
    %251 = vector.extract_strided_slice %250 {offsets = [0, 0], sizes = [2, 32], strides = [1, 1]} : vector<2x128xf32> to vector<2x32xf32>
    %252 = arith.negf %251 : vector<2x32xf32>
    %253 = math.exp %252 : vector<2x32xf32>
    %cst_41 = arith.constant 1.000000e+00 : f32
    %254 = vector.broadcast %cst_41 : f32 to vector<2x32xf32>
    %255 = arith.addf %254, %253 : vector<2x32xf32>
    %256 = arith.divf %254, %255 : vector<2x32xf32>
    %257 = vector.extract_strided_slice %250 {offsets = [0, 32], sizes = [2, 32], strides = [1, 1]} : vector<2x128xf32> to vector<2x32xf32>
    %258 = arith.negf %257 : vector<2x32xf32>
    %259 = math.exp %258 : vector<2x32xf32>
    %cst_42 = arith.constant 1.000000e+00 : f32
    %260 = vector.broadcast %cst_42 : f32 to vector<2x32xf32>
    %261 = arith.addf %260, %259 : vector<2x32xf32>
    %262 = arith.divf %260, %261 : vector<2x32xf32>
    %263 = vector.extract_strided_slice %250 {offsets = [0, 64], sizes = [2, 32], strides = [1, 1]} : vector<2x128xf32> to vector<2x32xf32>
    %264 = math.tanh %263 : vector<2x32xf32>
    %265 = vector.extract_strided_slice %250 {offsets = [0, 96], sizes = [2, 32], strides = [1, 1]} : vector<2x128xf32> to vector<2x32xf32>
    %266 = arith.negf %265 : vector<2x32xf32>
    %267 = math.exp %266 : vector<2x32xf32>
    %cst_43 = arith.constant 1.000000e+00 : f32
    %268 = vector.broadcast %cst_43 : f32 to vector<2x32xf32>
    %269 = arith.addf %268, %267 : vector<2x32xf32>
    %270 = arith.divf %268, %269 : vector<2x32xf32>
    %271 = arith.mulf %262, %242 : vector<2x32xf32>
    %272 = arith.mulf %256, %264 : vector<2x32xf32>
    %273 = arith.addf %271, %272 : vector<2x32xf32>
    %274 = math.tanh %273 : vector<2x32xf32>
    %275 = arith.mulf %270, %274 : vector<2x32xf32>
    %276 = vector.extract_strided_slice %58 {offsets = [0, 0], sizes = [2, 16], strides = [1, 1]} : vector<2x32xf32> to vector<2x16xf32>
    %277 = vector.extract_strided_slice %89 {offsets = [0, 0], sizes = [2, 16], strides = [1, 1]} : vector<2x32xf32> to vector<2x16xf32>
    %278 = vector.extract_strided_slice %120 {offsets = [0, 0], sizes = [2, 16], strides = [1, 1]} : vector<2x32xf32> to vector<2x16xf32>
    %279 = vector.extract_strided_slice %151 {offsets = [0, 0], sizes = [2, 16], strides = [1, 1]} : vector<2x32xf32> to vector<2x16xf32>
    %280 = vector.extract_strided_slice %182 {offsets = [0, 0], sizes = [2, 16], strides = [1, 1]} : vector<2x32xf32> to vector<2x16xf32>
    %281 = vector.extract_strided_slice %213 {offsets = [0, 0], sizes = [2, 16], strides = [1, 1]} : vector<2x32xf32> to vector<2x16xf32>
    %282 = vector.extract_strided_slice %244 {offsets = [0, 0], sizes = [2, 16], strides = [1, 1]} : vector<2x32xf32> to vector<2x16xf32>
    %283 = vector.extract_strided_slice %275 {offsets = [0, 0], sizes = [2, 16], strides = [1, 1]} : vector<2x32xf32> to vector<2x16xf32>
    %284 = tpu.concatenate %276, %277, %278, %279, %280, %281, %282, %283 in 0 : vector<2x16xf32>, vector<2x16xf32>, vector<2x16xf32>, vector<2x16xf32>, vector<2x16xf32>, vector<2x16xf32>, vector<2x16xf32>, vector<2x16xf32> -> vector<16x16xf32>
    %285 = vector.extract_strided_slice %275 {offsets = [0, 16], sizes = [2, 16], strides = [1, 1]} : vector<2x32xf32> to vector<2x16xf32>
    %286 = vector.extract_strided_slice %244 {offsets = [0, 16], sizes = [2, 16], strides = [1, 1]} : vector<2x32xf32> to vector<2x16xf32>
    %287 = vector.extract_strided_slice %213 {offsets = [0, 16], sizes = [2, 16], strides = [1, 1]} : vector<2x32xf32> to vector<2x16xf32>
    %288 = vector.extract_strided_slice %182 {offsets = [0, 16], sizes = [2, 16], strides = [1, 1]} : vector<2x32xf32> to vector<2x16xf32>
    %289 = vector.extract_strided_slice %151 {offsets = [0, 16], sizes = [2, 16], strides = [1, 1]} : vector<2x32xf32> to vector<2x16xf32>
    %290 = vector.extract_strided_slice %120 {offsets = [0, 16], sizes = [2, 16], strides = [1, 1]} : vector<2x32xf32> to vector<2x16xf32>
    %291 = vector.extract_strided_slice %89 {offsets = [0, 16], sizes = [2, 16], strides = [1, 1]} : vector<2x32xf32> to vector<2x16xf32>
    %292 = vector.extract_strided_slice %58 {offsets = [0, 16], sizes = [2, 16], strides = [1, 1]} : vector<2x32xf32> to vector<2x16xf32>
    %293 = tpu.concatenate %285, %286, %287, %288, %289, %290, %291, %292 in 0 : vector<2x16xf32>, vector<2x16xf32>, vector<2x16xf32>, vector<2x16xf32>, vector<2x16xf32>, vector<2x16xf32>, vector<2x16xf32>, vector<2x16xf32> -> vector<16x16xf32>
    %294 = tpu.concatenate %284, %293 in 1 : vector<16x16xf32>, vector<16x16xf32> -> vector<16x32xf32>
    %295 = arith.truncf %294 : vector<16x32xf32> to vector<16x32xbf16>
    %c0_44 = arith.constant 0 : index
    %c0_45 = arith.constant 0 : index
    %296 = vector.load %arg5[%c0_44, %c0_45] : memref<32x128xbf16, #tpu.memory_space<vmem>>, vector<32x128xbf16>
    %cst_46 = arith.constant dense<0.000000e+00> : vector<16x128xf32>
    %297 = tpu.matmul %295, %296, %cst_46 {dimension_numbers = #tpu.dot_dimension_numbers<[1], [0], [0], [1], [0, 0, 1, 1], [], []>} : vector<16x32xbf16>, vector<32x128xbf16>, vector<16x128xf32> -> vector<16x128xf32>
    %c0_47 = arith.constant 0 : index
    %c0_48 = arith.constant 0 : index
    %298 = vector.load %arg7[%c0_47, %c0_48] : memref<1x128xf32, #tpu.memory_space<vmem>>, vector<1x128xf32>
    %299 = vector.broadcast %298 : vector<1x128xf32> to vector<16x128xf32>
    %300 = arith.addf %297, %299 : vector<16x128xf32>
    %c0_49 = arith.constant 0 : index
    %c0_50 = arith.constant 0 : index
    %301 = vector.load %arg6[%c0_49, %c0_50] : memref<32x128xbf16, #tpu.memory_space<vmem>>, vector<32x128xbf16>
    %cst_51 = arith.constant 0.000000e+00 : f32
    %302 = vector.broadcast %cst_51 : f32 to vector<2x32xf32>
    %cst_52 = arith.constant 0.000000e+00 : f32
    %303 = vector.broadcast %cst_52 : f32 to vector<2x32xf32>
    %304 = vector.extract_strided_slice %300 {offsets = [0, 0], sizes = [2, 128], strides = [1, 1]} : vector<16x128xf32> to vector<2x128xf32>
    %305 = vector.extract_strided_slice %300 {offsets = [14, 0], sizes = [2, 128], strides = [1, 1]} : vector<16x128xf32> to vector<2x128xf32>
    %306 = arith.select %18, %304, %305 : vector<2x128xi1>, vector<2x128xf32>
    %307 = arith.truncf %302 : vector<2x32xf32> to vector<2x32xbf16>
    %cst_53 = arith.constant dense<0.000000e+00> : vector<2x128xf32>
    %308 = tpu.matmul %307, %301, %cst_53 {dimension_numbers = #tpu.dot_dimension_numbers<[1], [0], [0], [1], [0, 0, 1, 1], [], []>} : vector<2x32xbf16>, vector<32x128xbf16>, vector<2x128xf32> -> vector<2x128xf32>
    %309 = arith.addf %306, %308 : vector<2x128xf32>
    %310 = vector.extract_strided_slice %309 {offsets = [0, 0], sizes = [2, 32], strides = [1, 1]} : vector<2x128xf32> to vector<2x32xf32>
    %311 = arith.negf %310 : vector<2x32xf32>
    %312 = math.exp %311 : vector<2x32xf32>
    %cst_54 = arith.constant 1.000000e+00 : f32
    %313 = vector.broadcast %cst_54 : f32 to vector<2x32xf32>
    %314 = arith.addf %313, %312 : vector<2x32xf32>
    %315 = arith.divf %313, %314 : vector<2x32xf32>
    %316 = vector.extract_strided_slice %309 {offsets = [0, 32], sizes = [2, 32], strides = [1, 1]} : vector<2x128xf32> to vector<2x32xf32>
    %317 = arith.negf %316 : vector<2x32xf32>
    %318 = math.exp %317 : vector<2x32xf32>
    %cst_55 = arith.constant 1.000000e+00 : f32
    %319 = vector.broadcast %cst_55 : f32 to vector<2x32xf32>
    %320 = arith.addf %319, %318 : vector<2x32xf32>
    %321 = arith.divf %319, %320 : vector<2x32xf32>
    %322 = vector.extract_strided_slice %309 {offsets = [0, 64], sizes = [2, 32], strides = [1, 1]} : vector<2x128xf32> to vector<2x32xf32>
    %323 = math.tanh %322 : vector<2x32xf32>
    %324 = vector.extract_strided_slice %309 {offsets = [0, 96], sizes = [2, 32], strides = [1, 1]} : vector<2x128xf32> to vector<2x32xf32>
    %325 = arith.negf %324 : vector<2x32xf32>
    %326 = math.exp %325 : vector<2x32xf32>
    %cst_56 = arith.constant 1.000000e+00 : f32
    %327 = vector.broadcast %cst_56 : f32 to vector<2x32xf32>
    %328 = arith.addf %327, %326 : vector<2x32xf32>
    %329 = arith.divf %327, %328 : vector<2x32xf32>
    %330 = arith.mulf %321, %303 : vector<2x32xf32>
    %331 = arith.mulf %315, %323 : vector<2x32xf32>
    %332 = arith.addf %330, %331 : vector<2x32xf32>
    %333 = math.tanh %332 : vector<2x32xf32>
    %334 = arith.mulf %329, %333 : vector<2x32xf32>
    %335 = vector.extract_strided_slice %300 {offsets = [2, 0], sizes = [2, 128], strides = [1, 1]} : vector<16x128xf32> to vector<2x128xf32>
    %336 = vector.extract_strided_slice %300 {offsets = [12, 0], sizes = [2, 128], strides = [1, 1]} : vector<16x128xf32> to vector<2x128xf32>
    %337 = arith.select %18, %335, %336 : vector<2x128xi1>, vector<2x128xf32>
    %338 = arith.truncf %334 : vector<2x32xf32> to vector<2x32xbf16>
    %cst_57 = arith.constant dense<0.000000e+00> : vector<2x128xf32>
    %339 = tpu.matmul %338, %301, %cst_57 {dimension_numbers = #tpu.dot_dimension_numbers<[1], [0], [0], [1], [0, 0, 1, 1], [], []>} : vector<2x32xbf16>, vector<32x128xbf16>, vector<2x128xf32> -> vector<2x128xf32>
    %340 = arith.addf %337, %339 : vector<2x128xf32>
    %341 = vector.extract_strided_slice %340 {offsets = [0, 0], sizes = [2, 32], strides = [1, 1]} : vector<2x128xf32> to vector<2x32xf32>
    %342 = arith.negf %341 : vector<2x32xf32>
    %343 = math.exp %342 : vector<2x32xf32>
    %cst_58 = arith.constant 1.000000e+00 : f32
    %344 = vector.broadcast %cst_58 : f32 to vector<2x32xf32>
    %345 = arith.addf %344, %343 : vector<2x32xf32>
    %346 = arith.divf %344, %345 : vector<2x32xf32>
    %347 = vector.extract_strided_slice %340 {offsets = [0, 32], sizes = [2, 32], strides = [1, 1]} : vector<2x128xf32> to vector<2x32xf32>
    %348 = arith.negf %347 : vector<2x32xf32>
    %349 = math.exp %348 : vector<2x32xf32>
    %cst_59 = arith.constant 1.000000e+00 : f32
    %350 = vector.broadcast %cst_59 : f32 to vector<2x32xf32>
    %351 = arith.addf %350, %349 : vector<2x32xf32>
    %352 = arith.divf %350, %351 : vector<2x32xf32>
    %353 = vector.extract_strided_slice %340 {offsets = [0, 64], sizes = [2, 32], strides = [1, 1]} : vector<2x128xf32> to vector<2x32xf32>
    %354 = math.tanh %353 : vector<2x32xf32>
    %355 = vector.extract_strided_slice %340 {offsets = [0, 96], sizes = [2, 32], strides = [1, 1]} : vector<2x128xf32> to vector<2x32xf32>
    %356 = arith.negf %355 : vector<2x32xf32>
    %357 = math.exp %356 : vector<2x32xf32>
    %cst_60 = arith.constant 1.000000e+00 : f32
    %358 = vector.broadcast %cst_60 : f32 to vector<2x32xf32>
    %359 = arith.addf %358, %357 : vector<2x32xf32>
    %360 = arith.divf %358, %359 : vector<2x32xf32>
    %361 = arith.mulf %352, %332 : vector<2x32xf32>
    %362 = arith.mulf %346, %354 : vector<2x32xf32>
    %363 = arith.addf %361, %362 : vector<2x32xf32>
    %364 = math.tanh %363 : vector<2x32xf32>
    %365 = arith.mulf %360, %364 : vector<2x32xf32>
    %366 = vector.extract_strided_slice %300 {offsets = [4, 0], sizes = [2, 128], strides = [1, 1]} : vector<16x128xf32> to vector<2x128xf32>
    %367 = vector.extract_strided_slice %300 {offsets = [10, 0], sizes = [2, 128], strides = [1, 1]} : vector<16x128xf32> to vector<2x128xf32>
    %368 = arith.select %18, %366, %367 : vector<2x128xi1>, vector<2x128xf32>
    %369 = arith.truncf %365 : vector<2x32xf32> to vector<2x32xbf16>
    %cst_61 = arith.constant dense<0.000000e+00> : vector<2x128xf32>
    %370 = tpu.matmul %369, %301, %cst_61 {dimension_numbers = #tpu.dot_dimension_numbers<[1], [0], [0], [1], [0, 0, 1, 1], [], []>} : vector<2x32xbf16>, vector<32x128xbf16>, vector<2x128xf32> -> vector<2x128xf32>
    %371 = arith.addf %368, %370 : vector<2x128xf32>
    %372 = vector.extract_strided_slice %371 {offsets = [0, 0], sizes = [2, 32], strides = [1, 1]} : vector<2x128xf32> to vector<2x32xf32>
    %373 = arith.negf %372 : vector<2x32xf32>
    %374 = math.exp %373 : vector<2x32xf32>
    %cst_62 = arith.constant 1.000000e+00 : f32
    %375 = vector.broadcast %cst_62 : f32 to vector<2x32xf32>
    %376 = arith.addf %375, %374 : vector<2x32xf32>
    %377 = arith.divf %375, %376 : vector<2x32xf32>
    %378 = vector.extract_strided_slice %371 {offsets = [0, 32], sizes = [2, 32], strides = [1, 1]} : vector<2x128xf32> to vector<2x32xf32>
    %379 = arith.negf %378 : vector<2x32xf32>
    %380 = math.exp %379 : vector<2x32xf32>
    %cst_63 = arith.constant 1.000000e+00 : f32
    %381 = vector.broadcast %cst_63 : f32 to vector<2x32xf32>
    %382 = arith.addf %381, %380 : vector<2x32xf32>
    %383 = arith.divf %381, %382 : vector<2x32xf32>
    %384 = vector.extract_strided_slice %371 {offsets = [0, 64], sizes = [2, 32], strides = [1, 1]} : vector<2x128xf32> to vector<2x32xf32>
    %385 = math.tanh %384 : vector<2x32xf32>
    %386 = vector.extract_strided_slice %371 {offsets = [0, 96], sizes = [2, 32], strides = [1, 1]} : vector<2x128xf32> to vector<2x32xf32>
    %387 = arith.negf %386 : vector<2x32xf32>
    %388 = math.exp %387 : vector<2x32xf32>
    %cst_64 = arith.constant 1.000000e+00 : f32
    %389 = vector.broadcast %cst_64 : f32 to vector<2x32xf32>
    %390 = arith.addf %389, %388 : vector<2x32xf32>
    %391 = arith.divf %389, %390 : vector<2x32xf32>
    %392 = arith.mulf %383, %363 : vector<2x32xf32>
    %393 = arith.mulf %377, %385 : vector<2x32xf32>
    %394 = arith.addf %392, %393 : vector<2x32xf32>
    %395 = math.tanh %394 : vector<2x32xf32>
    %396 = arith.mulf %391, %395 : vector<2x32xf32>
    %397 = vector.extract_strided_slice %300 {offsets = [6, 0], sizes = [2, 128], strides = [1, 1]} : vector<16x128xf32> to vector<2x128xf32>
    %398 = vector.extract_strided_slice %300 {offsets = [8, 0], sizes = [2, 128], strides = [1, 1]} : vector<16x128xf32> to vector<2x128xf32>
    %399 = arith.select %18, %397, %398 : vector<2x128xi1>, vector<2x128xf32>
    %400 = arith.truncf %396 : vector<2x32xf32> to vector<2x32xbf16>
    %cst_65 = arith.constant dense<0.000000e+00> : vector<2x128xf32>
    %401 = tpu.matmul %400, %301, %cst_65 {dimension_numbers = #tpu.dot_dimension_numbers<[1], [0], [0], [1], [0, 0, 1, 1], [], []>} : vector<2x32xbf16>, vector<32x128xbf16>, vector<2x128xf32> -> vector<2x128xf32>
    %402 = arith.addf %399, %401 : vector<2x128xf32>
    %403 = vector.extract_strided_slice %402 {offsets = [0, 0], sizes = [2, 32], strides = [1, 1]} : vector<2x128xf32> to vector<2x32xf32>
    %404 = arith.negf %403 : vector<2x32xf32>
    %405 = math.exp %404 : vector<2x32xf32>
    %cst_66 = arith.constant 1.000000e+00 : f32
    %406 = vector.broadcast %cst_66 : f32 to vector<2x32xf32>
    %407 = arith.addf %406, %405 : vector<2x32xf32>
    %408 = arith.divf %406, %407 : vector<2x32xf32>
    %409 = vector.extract_strided_slice %402 {offsets = [0, 32], sizes = [2, 32], strides = [1, 1]} : vector<2x128xf32> to vector<2x32xf32>
    %410 = arith.negf %409 : vector<2x32xf32>
    %411 = math.exp %410 : vector<2x32xf32>
    %cst_67 = arith.constant 1.000000e+00 : f32
    %412 = vector.broadcast %cst_67 : f32 to vector<2x32xf32>
    %413 = arith.addf %412, %411 : vector<2x32xf32>
    %414 = arith.divf %412, %413 : vector<2x32xf32>
    %415 = vector.extract_strided_slice %402 {offsets = [0, 64], sizes = [2, 32], strides = [1, 1]} : vector<2x128xf32> to vector<2x32xf32>
    %416 = math.tanh %415 : vector<2x32xf32>
    %417 = vector.extract_strided_slice %402 {offsets = [0, 96], sizes = [2, 32], strides = [1, 1]} : vector<2x128xf32> to vector<2x32xf32>
    %418 = arith.negf %417 : vector<2x32xf32>
    %419 = math.exp %418 : vector<2x32xf32>
    %cst_68 = arith.constant 1.000000e+00 : f32
    %420 = vector.broadcast %cst_68 : f32 to vector<2x32xf32>
    %421 = arith.addf %420, %419 : vector<2x32xf32>
    %422 = arith.divf %420, %421 : vector<2x32xf32>
    %423 = arith.mulf %414, %394 : vector<2x32xf32>
    %424 = arith.mulf %408, %416 : vector<2x32xf32>
    %425 = arith.addf %423, %424 : vector<2x32xf32>
    %426 = math.tanh %425 : vector<2x32xf32>
    %427 = arith.mulf %422, %426 : vector<2x32xf32>
    %428 = vector.extract_strided_slice %300 {offsets = [8, 0], sizes = [2, 128], strides = [1, 1]} : vector<16x128xf32> to vector<2x128xf32>
    %429 = vector.extract_strided_slice %300 {offsets = [6, 0], sizes = [2, 128], strides = [1, 1]} : vector<16x128xf32> to vector<2x128xf32>
    %430 = arith.select %18, %428, %429 : vector<2x128xi1>, vector<2x128xf32>
    %431 = arith.truncf %427 : vector<2x32xf32> to vector<2x32xbf16>
    %cst_69 = arith.constant dense<0.000000e+00> : vector<2x128xf32>
    %432 = tpu.matmul %431, %301, %cst_69 {dimension_numbers = #tpu.dot_dimension_numbers<[1], [0], [0], [1], [0, 0, 1, 1], [], []>} : vector<2x32xbf16>, vector<32x128xbf16>, vector<2x128xf32> -> vector<2x128xf32>
    %433 = arith.addf %430, %432 : vector<2x128xf32>
    %434 = vector.extract_strided_slice %433 {offsets = [0, 0], sizes = [2, 32], strides = [1, 1]} : vector<2x128xf32> to vector<2x32xf32>
    %435 = arith.negf %434 : vector<2x32xf32>
    %436 = math.exp %435 : vector<2x32xf32>
    %cst_70 = arith.constant 1.000000e+00 : f32
    %437 = vector.broadcast %cst_70 : f32 to vector<2x32xf32>
    %438 = arith.addf %437, %436 : vector<2x32xf32>
    %439 = arith.divf %437, %438 : vector<2x32xf32>
    %440 = vector.extract_strided_slice %433 {offsets = [0, 32], sizes = [2, 32], strides = [1, 1]} : vector<2x128xf32> to vector<2x32xf32>
    %441 = arith.negf %440 : vector<2x32xf32>
    %442 = math.exp %441 : vector<2x32xf32>
    %cst_71 = arith.constant 1.000000e+00 : f32
    %443 = vector.broadcast %cst_71 : f32 to vector<2x32xf32>
    %444 = arith.addf %443, %442 : vector<2x32xf32>
    %445 = arith.divf %443, %444 : vector<2x32xf32>
    %446 = vector.extract_strided_slice %433 {offsets = [0, 64], sizes = [2, 32], strides = [1, 1]} : vector<2x128xf32> to vector<2x32xf32>
    %447 = math.tanh %446 : vector<2x32xf32>
    %448 = vector.extract_strided_slice %433 {offsets = [0, 96], sizes = [2, 32], strides = [1, 1]} : vector<2x128xf32> to vector<2x32xf32>
    %449 = arith.negf %448 : vector<2x32xf32>
    %450 = math.exp %449 : vector<2x32xf32>
    %cst_72 = arith.constant 1.000000e+00 : f32
    %451 = vector.broadcast %cst_72 : f32 to vector<2x32xf32>
    %452 = arith.addf %451, %450 : vector<2x32xf32>
    %453 = arith.divf %451, %452 : vector<2x32xf32>
    %454 = arith.mulf %445, %425 : vector<2x32xf32>
    %455 = arith.mulf %439, %447 : vector<2x32xf32>
    %456 = arith.addf %454, %455 : vector<2x32xf32>
    %457 = math.tanh %456 : vector<2x32xf32>
    %458 = arith.mulf %453, %457 : vector<2x32xf32>
    %459 = vector.extract_strided_slice %300 {offsets = [10, 0], sizes = [2, 128], strides = [1, 1]} : vector<16x128xf32> to vector<2x128xf32>
    %460 = vector.extract_strided_slice %300 {offsets = [4, 0], sizes = [2, 128], strides = [1, 1]} : vector<16x128xf32> to vector<2x128xf32>
    %461 = arith.select %18, %459, %460 : vector<2x128xi1>, vector<2x128xf32>
    %462 = arith.truncf %458 : vector<2x32xf32> to vector<2x32xbf16>
    %cst_73 = arith.constant dense<0.000000e+00> : vector<2x128xf32>
    %463 = tpu.matmul %462, %301, %cst_73 {dimension_numbers = #tpu.dot_dimension_numbers<[1], [0], [0], [1], [0, 0, 1, 1], [], []>} : vector<2x32xbf16>, vector<32x128xbf16>, vector<2x128xf32> -> vector<2x128xf32>
    %464 = arith.addf %461, %463 : vector<2x128xf32>
    %465 = vector.extract_strided_slice %464 {offsets = [0, 0], sizes = [2, 32], strides = [1, 1]} : vector<2x128xf32> to vector<2x32xf32>
    %466 = arith.negf %465 : vector<2x32xf32>
    %467 = math.exp %466 : vector<2x32xf32>
    %cst_74 = arith.constant 1.000000e+00 : f32
    %468 = vector.broadcast %cst_74 : f32 to vector<2x32xf32>
    %469 = arith.addf %468, %467 : vector<2x32xf32>
    %470 = arith.divf %468, %469 : vector<2x32xf32>
    %471 = vector.extract_strided_slice %464 {offsets = [0, 32], sizes = [2, 32], strides = [1, 1]} : vector<2x128xf32> to vector<2x32xf32>
    %472 = arith.negf %471 : vector<2x32xf32>
    %473 = math.exp %472 : vector<2x32xf32>
    %cst_75 = arith.constant 1.000000e+00 : f32
    %474 = vector.broadcast %cst_75 : f32 to vector<2x32xf32>
    %475 = arith.addf %474, %473 : vector<2x32xf32>
    %476 = arith.divf %474, %475 : vector<2x32xf32>
    %477 = vector.extract_strided_slice %464 {offsets = [0, 64], sizes = [2, 32], strides = [1, 1]} : vector<2x128xf32> to vector<2x32xf32>
    %478 = math.tanh %477 : vector<2x32xf32>
    %479 = vector.extract_strided_slice %464 {offsets = [0, 96], sizes = [2, 32], strides = [1, 1]} : vector<2x128xf32> to vector<2x32xf32>
    %480 = arith.negf %479 : vector<2x32xf32>
    %481 = math.exp %480 : vector<2x32xf32>
    %cst_76 = arith.constant 1.000000e+00 : f32
    %482 = vector.broadcast %cst_76 : f32 to vector<2x32xf32>
    %483 = arith.addf %482, %481 : vector<2x32xf32>
    %484 = arith.divf %482, %483 : vector<2x32xf32>
    %485 = arith.mulf %476, %456 : vector<2x32xf32>
    %486 = arith.mulf %470, %478 : vector<2x32xf32>
    %487 = arith.addf %485, %486 : vector<2x32xf32>
    %488 = math.tanh %487 : vector<2x32xf32>
    %489 = arith.mulf %484, %488 : vector<2x32xf32>
    %490 = vector.extract_strided_slice %300 {offsets = [12, 0], sizes = [2, 128], strides = [1, 1]} : vector<16x128xf32> to vector<2x128xf32>
    %491 = vector.extract_strided_slice %300 {offsets = [2, 0], sizes = [2, 128], strides = [1, 1]} : vector<16x128xf32> to vector<2x128xf32>
    %492 = arith.select %18, %490, %491 : vector<2x128xi1>, vector<2x128xf32>
    %493 = arith.truncf %489 : vector<2x32xf32> to vector<2x32xbf16>
    %cst_77 = arith.constant dense<0.000000e+00> : vector<2x128xf32>
    %494 = tpu.matmul %493, %301, %cst_77 {dimension_numbers = #tpu.dot_dimension_numbers<[1], [0], [0], [1], [0, 0, 1, 1], [], []>} : vector<2x32xbf16>, vector<32x128xbf16>, vector<2x128xf32> -> vector<2x128xf32>
    %495 = arith.addf %492, %494 : vector<2x128xf32>
    %496 = vector.extract_strided_slice %495 {offsets = [0, 0], sizes = [2, 32], strides = [1, 1]} : vector<2x128xf32> to vector<2x32xf32>
    %497 = arith.negf %496 : vector<2x32xf32>
    %498 = math.exp %497 : vector<2x32xf32>
    %cst_78 = arith.constant 1.000000e+00 : f32
    %499 = vector.broadcast %cst_78 : f32 to vector<2x32xf32>
    %500 = arith.addf %499, %498 : vector<2x32xf32>
    %501 = arith.divf %499, %500 : vector<2x32xf32>
    %502 = vector.extract_strided_slice %495 {offsets = [0, 32], sizes = [2, 32], strides = [1, 1]} : vector<2x128xf32> to vector<2x32xf32>
    %503 = arith.negf %502 : vector<2x32xf32>
    %504 = math.exp %503 : vector<2x32xf32>
    %cst_79 = arith.constant 1.000000e+00 : f32
    %505 = vector.broadcast %cst_79 : f32 to vector<2x32xf32>
    %506 = arith.addf %505, %504 : vector<2x32xf32>
    %507 = arith.divf %505, %506 : vector<2x32xf32>
    %508 = vector.extract_strided_slice %495 {offsets = [0, 64], sizes = [2, 32], strides = [1, 1]} : vector<2x128xf32> to vector<2x32xf32>
    %509 = math.tanh %508 : vector<2x32xf32>
    %510 = vector.extract_strided_slice %495 {offsets = [0, 96], sizes = [2, 32], strides = [1, 1]} : vector<2x128xf32> to vector<2x32xf32>
    %511 = arith.negf %510 : vector<2x32xf32>
    %512 = math.exp %511 : vector<2x32xf32>
    %cst_80 = arith.constant 1.000000e+00 : f32
    %513 = vector.broadcast %cst_80 : f32 to vector<2x32xf32>
    %514 = arith.addf %513, %512 : vector<2x32xf32>
    %515 = arith.divf %513, %514 : vector<2x32xf32>
    %516 = arith.mulf %507, %487 : vector<2x32xf32>
    %517 = arith.mulf %501, %509 : vector<2x32xf32>
    %518 = arith.addf %516, %517 : vector<2x32xf32>
    %519 = math.tanh %518 : vector<2x32xf32>
    %520 = arith.mulf %515, %519 : vector<2x32xf32>
    %521 = vector.extract_strided_slice %300 {offsets = [14, 0], sizes = [2, 128], strides = [1, 1]} : vector<16x128xf32> to vector<2x128xf32>
    %522 = vector.extract_strided_slice %300 {offsets = [0, 0], sizes = [2, 128], strides = [1, 1]} : vector<16x128xf32> to vector<2x128xf32>
    %523 = arith.select %18, %521, %522 : vector<2x128xi1>, vector<2x128xf32>
    %524 = arith.truncf %520 : vector<2x32xf32> to vector<2x32xbf16>
    %cst_81 = arith.constant dense<0.000000e+00> : vector<2x128xf32>
    %525 = tpu.matmul %524, %301, %cst_81 {dimension_numbers = #tpu.dot_dimension_numbers<[1], [0], [0], [1], [0, 0, 1, 1], [], []>} : vector<2x32xbf16>, vector<32x128xbf16>, vector<2x128xf32> -> vector<2x128xf32>
    %526 = arith.addf %523, %525 : vector<2x128xf32>
    %527 = vector.extract_strided_slice %526 {offsets = [0, 0], sizes = [2, 32], strides = [1, 1]} : vector<2x128xf32> to vector<2x32xf32>
    %528 = arith.negf %527 : vector<2x32xf32>
    %529 = math.exp %528 : vector<2x32xf32>
    %cst_82 = arith.constant 1.000000e+00 : f32
    %530 = vector.broadcast %cst_82 : f32 to vector<2x32xf32>
    %531 = arith.addf %530, %529 : vector<2x32xf32>
    %532 = arith.divf %530, %531 : vector<2x32xf32>
    %533 = vector.extract_strided_slice %526 {offsets = [0, 32], sizes = [2, 32], strides = [1, 1]} : vector<2x128xf32> to vector<2x32xf32>
    %534 = arith.negf %533 : vector<2x32xf32>
    %535 = math.exp %534 : vector<2x32xf32>
    %cst_83 = arith.constant 1.000000e+00 : f32
    %536 = vector.broadcast %cst_83 : f32 to vector<2x32xf32>
    %537 = arith.addf %536, %535 : vector<2x32xf32>
    %538 = arith.divf %536, %537 : vector<2x32xf32>
    %539 = vector.extract_strided_slice %526 {offsets = [0, 64], sizes = [2, 32], strides = [1, 1]} : vector<2x128xf32> to vector<2x32xf32>
    %540 = math.tanh %539 : vector<2x32xf32>
    %541 = vector.extract_strided_slice %526 {offsets = [0, 96], sizes = [2, 32], strides = [1, 1]} : vector<2x128xf32> to vector<2x32xf32>
    %542 = arith.negf %541 : vector<2x32xf32>
    %543 = math.exp %542 : vector<2x32xf32>
    %cst_84 = arith.constant 1.000000e+00 : f32
    %544 = vector.broadcast %cst_84 : f32 to vector<2x32xf32>
    %545 = arith.addf %544, %543 : vector<2x32xf32>
    %546 = arith.divf %544, %545 : vector<2x32xf32>
    %547 = arith.mulf %538, %518 : vector<2x32xf32>
    %548 = arith.mulf %532, %540 : vector<2x32xf32>
    %549 = arith.addf %547, %548 : vector<2x32xf32>
    %550 = math.tanh %549 : vector<2x32xf32>
    %551 = arith.mulf %546, %550 : vector<2x32xf32>
    %552 = arith.maximumf %334, %365 : vector<2x32xf32>
    %553 = arith.maximumf %552, %396 : vector<2x32xf32>
    %554 = arith.maximumf %553, %427 : vector<2x32xf32>
    %555 = arith.maximumf %554, %458 : vector<2x32xf32>
    %556 = arith.maximumf %555, %489 : vector<2x32xf32>
    %557 = arith.maximumf %556, %520 : vector<2x32xf32>
    %558 = arith.maximumf %557, %551 : vector<2x32xf32>
    %559 = arith.truncf %558 : vector<2x32xf32> to vector<2x32xbf16>
    %c0_85 = arith.constant 0 : index
    %c0_86 = arith.constant 0 : index
    %560 = vector.load %arg8[%c0_85, %c0_86] : memref<32x32xbf16, #tpu.memory_space<vmem>>, vector<32x32xbf16>
    %cst_87 = arith.constant dense<0.000000e+00> : vector<2x32xf32>
    %561 = tpu.matmul %559, %560, %cst_87 {dimension_numbers = #tpu.dot_dimension_numbers<[1], [0], [0], [1], [0, 0, 1, 1], [], []>} : vector<2x32xbf16>, vector<32x32xbf16>, vector<2x32xf32> -> vector<2x32xf32>
    %c0_88 = arith.constant 0 : index
    %c0_89 = arith.constant 0 : index
    %562 = vector.load %arg9[%c0_88, %c0_89] : memref<1x32xf32, #tpu.memory_space<vmem>>, vector<1x32xf32>
    %563 = vector.broadcast %562 : vector<1x32xf32> to vector<2x32xf32>
    %564 = arith.addf %561, %563 : vector<2x32xf32>
    %cst_90 = arith.constant 0.000000e+00 : f32
    %565 = vector.broadcast %cst_90 : f32 to vector<2x32xf32>
    %566 = arith.maximumf %564, %565 : vector<2x32xf32>
    %567 = arith.truncf %566 : vector<2x32xf32> to vector<2x32xbf16>
    %c0_91 = arith.constant 0 : index
    %c0_92 = arith.constant 0 : index
    %568 = vector.load %arg10[%c0_91, %c0_92] : memref<32x128xbf16, #tpu.memory_space<vmem>>, vector<32x128xbf16>
    %cst_93 = arith.constant dense<0.000000e+00> : vector<2x128xf32>
    %569 = tpu.matmul %567, %568, %cst_93 {dimension_numbers = #tpu.dot_dimension_numbers<[1], [0], [0], [1], [0, 0, 1, 1], [], []>} : vector<2x32xbf16>, vector<32x128xbf16>, vector<2x128xf32> -> vector<2x128xf32>
    %c0_94 = arith.constant 0 : index
    %c0_95 = arith.constant 0 : index
    %570 = vector.load %arg11[%c0_94, %c0_95] : memref<1x128xf32, #tpu.memory_space<vmem>>, vector<1x128xf32>
    %571 = vector.broadcast %570 : vector<1x128xf32> to vector<2x128xf32>
    %572 = arith.addf %569, %571 : vector<2x128xf32>
    %c0_96 = arith.constant 0 : index
    %c0_97 = arith.constant 0 : index
    %573 = vector.load %arg12[%c0_96, %c0_97] : memref<2x128xf32, #tpu.memory_space<vmem>>, vector<2x128xf32>
    tpu.vector_store %arg12[%c0_96, %c0_97], %572 {strides = array<i32>} : memref<2x128xf32, #tpu.memory_space<vmem>>, vector<2x128xf32>,
    return
  }
  func.func @transform_0(%arg0: i32) -> (i32, i32) {
    %c0_i32 = arith.constant 0 : i32
    %c0_i32_0 = arith.constant 0 : i32
    return %arg0, %c0_i32 : i32, i32
  }
  func.func @transform_1(%arg0: i32) -> (i32, i32) {
    %c0_i32 = arith.constant 0 : i32
    %c0_i32_0 = arith.constant 0 : i32
    %c0_i32_1 = arith.constant 0 : i32
    return %c0_i32, %c0_i32_0 : i32, i32
  }
  func.func @transform_2(%arg0: i32) -> (i32, i32) {
    %c0_i32 = arith.constant 0 : i32
    %c0_i32_0 = arith.constant 0 : i32
    %c0_i32_1 = arith.constant 0 : i32
    return %c0_i32, %c0_i32_0 : i32, i32
  }
  func.func @transform_3(%arg0: i32) -> (i32, i32) {
    %c0_i32 = arith.constant 0 : i32
    %c0_i32_0 = arith.constant 0 : i32
    %c0_i32_1 = arith.constant 0 : i32
    return %c0_i32, %c0_i32_0 : i32, i32
  }
  func.func @transform_4(%arg0: i32) -> (i32, i32) {
    %c0_i32 = arith.constant 0 : i32
    %c0_i32_0 = arith.constant 0 : i32
    %c0_i32_1 = arith.constant 0 : i32
    return %c0_i32, %c0_i32_0 : i32, i32
  }
  func.func @transform_5(%arg0: i32) -> (i32, i32) {
    %c0_i32 = arith.constant 0 : i32
    %c0_i32_0 = arith.constant 0 : i32
    %c0_i32_1 = arith.constant 0 : i32
    return %c0_i32, %c0_i32_0 : i32, i32
  }
  func.func @transform_6(%arg0: i32) -> (i32, i32) {
    %c0_i32 = arith.constant 0 : i32
    %c0_i32_0 = arith.constant 0 : i32
    %c0_i32_1 = arith.constant 0 : i32
    return %c0_i32, %c0_i32_0 : i32, i32
  }
  func.func @transform_7(%arg0: i32) -> (i32, i32) {
    %c0_i32 = arith.constant 0 : i32
    %c0_i32_0 = arith.constant 0 : i32
    %c0_i32_1 = arith.constant 0 : i32
    return %c0_i32, %c0_i32_0 : i32, i32
  }
  func.func @transform_8(%arg0: i32) -> (i32, i32) {
    %c0_i32 = arith.constant 0 : i32
    %c0_i32_0 = arith.constant 0 : i32
    %c0_i32_1 = arith.constant 0 : i32
    return %c0_i32, %c0_i32_0 : i32, i32
  }
  func.func @transform_9(%arg0: i32) -> (i32, i32) {
    %c0_i32 = arith.constant 0 : i32
    %c0_i32_0 = arith.constant 0 : i32
    %c0_i32_1 = arith.constant 0 : i32
    return %c0_i32, %c0_i32_0 : i32, i32
  }
  func.func @transform_10(%arg0: i32) -> (i32, i32) {
    %c0_i32 = arith.constant 0 : i32
    %c0_i32_0 = arith.constant 0 : i32
    %c0_i32_1 = arith.constant 0 : i32
    return %c0_i32, %c0_i32_0 : i32, i32
  }
  func.func @transform_11(%arg0: i32) -> (i32, i32) {
    %c0_i32 = arith.constant 0 : i32
    %c0_i32_0 = arith.constant 0 : i32
    return %arg0, %c0_i32 : i32, i32
  }
}

</mosaic_0001>

<llo_original>
// kernel: tpu_custom_call.1
$region0: #{tpu_custom_call.1}
  #allocation0 [shape = 'u32[]', space=smem, size = 0x4, offset = 0x4, fixed_abs, tag = 'smem constant byte address 0x4 - core index']
  #allocation1 [shape = 'u32[144,128]{1,0:T(1,128)}', space=vmem, size = 0x12000, scoped, tag = 'internal scratch']
  %s0 = inlined_call_operand.hbm [shape: bf16[16,32], index: 0, kind: input, shape index: {}]
  %s1 = inlined_call_operand.hbm [shape: bf16[32,128], index: 1, kind: input, shape index: {}]
  %s2 = inlined_call_operand.hbm [shape: bf16[32,128], index: 2, kind: input, shape index: {}]
  %s3 = inlined_call_operand.hbm [shape: f32[1,128], index: 3, kind: input, shape index: {}]
  %s4 = inlined_call_operand.hbm [shape: bf16[32,128], index: 4, kind: input, shape index: {}]
  %s5 = inlined_call_operand.hbm [shape: bf16[32,128], index: 5, kind: input, shape index: {}]
  %s6 = inlined_call_operand.hbm [shape: f32[1,128], index: 6, kind: input, shape index: {}]
  %s7 = inlined_call_operand.hbm [shape: bf16[32,32], index: 7, kind: input, shape index: {}]
  %s8 = inlined_call_operand.hbm [shape: f32[1,32], index: 8, kind: input, shape index: {}]
  %s9 = inlined_call_operand.vmem [shape: bf16[32,128], index: 9, kind: input, shape index: {}]
  %s10 = inlined_call_operand.vmem [shape: f32[1,128], index: 10, kind: input, shape index: {}]
  %s11 = inlined_call_operand.hbm [shape: f32[2,128], index: 11, kind: output, shape index: {}]
  %s12 = sld [smem:[#allocation0]]
  $region90: #{tpu_custom_call.1} parent=0
    _
  %s14 = ssub.s32 1, %s12
  %s15 = scalar_select 0, %s14, %s12
  $region1: #{tpu_custom_call.1} parent=0
    #allocation2 [shape = 'u8[4096]{0}', space=vmem, size = 0x1000, scoped, tag = 'input window, operand 0, single buffered']
    #allocation3 [shape = 's32[1]{0}', space=sflag, size = 0x4, scoped, tag = 'scoped memory for tpu_custom_call.1']
    #allocation4 [shape = 's32[1]{0}', space=sflag, size = 0x4, scoped, tag = 'scoped memory for tpu_custom_call.1']
    #allocation5 [shape = 'u8[8192]{0}', space=vmem, size = 0x2000, scoped, tag = 'input window, operand 1, single buffered']
    #allocation6 [shape = 's32[1]{0}', space=sflag, size = 0x4, scoped, tag = 'scoped memory for tpu_custom_call.1']
    #allocation7 [shape = 'u8[8192]{0}', space=vmem, size = 0x2000, scoped, tag = 'input window, operand 2, single buffered']
    #allocation8 [shape = 'u8[512]{0}', space=vmem, size = 0x400, scoped, tag = 'input window, operand 3, single buffered']
    #allocation9 [shape = 's32[1]{0}', space=sflag, size = 0x4, scoped, tag = 'scoped memory for tpu_custom_call.1']
    #allocation10 [shape = 'u8[8192]{0}', space=vmem, size = 0x2000, scoped, tag = 'input window, operand 4, single buffered']
    #allocation11 [shape = 'u8[8192]{0}', space=vmem, size = 0x2000, scoped, tag = 'input window, operand 5, single buffered']
    #allocation12 [shape = 's32[1]{0}', space=sflag, size = 0x4, scoped, tag = 'scoped memory for tpu_custom_call.1']
    #allocation13 [shape = 'u8[512]{0}', space=vmem, size = 0x400, scoped, tag = 'input window, operand 6, single buffered']
    #allocation14 [shape = 'u8[8192]{0}', space=vmem, size = 0x2000, scoped, tag = 'input window, operand 7, single buffered']
    #allocation15 [shape = 's32[1]{0}', space=sflag, size = 0x4, scoped, tag = 'scoped memory for tpu_custom_call.1']
    #allocation16 [shape = 'u8[512]{0}', space=vmem, size = 0x400, scoped, tag = 'input window, operand 8, single buffered']
    #allocation17 [shape = 'u8[1024]{0}', space=vmem, size = 0x400, scoped, tag = 'output window, operand 0, single buffered']
    %16 = vsyncpa [#allocation3], 0
    %17 = vsyncpa [#allocation6], 0
    %18 = vsyncpa [#allocation9], 0
    %19 = vsyncpa [#allocation12], 0
    %20 = vsyncpa [#allocation15], 0
    %21 = vsyncpa [#allocation4], 0
    // Predicated region
    $region2: #{tpu_custom_call.1} parent=1 // pred_check
      _
    $region3: #{tpu_custom_call.1} parent=1 // pred_check_branch
      %23 = sbr.rel (0) target = $region5
    $region4: #{tpu_custom_call.1} parent=1 // pred_region
      %s25 = ssub.s32 128, 128
      %26 = vsyncadd [#allocation3], %s25
      %s27 = sshll.u32 [#allocation2], 4
      %s28 = int_to_ptr.vmem [resolvable:$true] %s27
      %33 = dma.hbm_to_vmem [thread:$0]  %s0, 128, %s28, [#allocation3], 64, 64, 4
    $region5: #{tpu_custom_call.1} parent=1 // pred_fallthru
      _
    // Predicated region
    $region6: #{tpu_custom_call.1} parent=1 // pred_check
      _
    $region7: #{tpu_custom_call.1} parent=1 // pred_check_branch
      %35 = sbr.rel (0) target = $region9
    $region8: #{tpu_custom_call.1} parent=1 // pred_region
      %s37 = ssub.s32 256, 256
      %38 = vsyncadd [#allocation6], %s37
      %s39 = sshll.u32 [#allocation5], 4
      %s40 = int_to_ptr.vmem [resolvable:$true] %s39
      %45 = dma.hbm_to_vmem [thread:$0]  %s1, 256, %s40, [#allocation6], 64, 64, 4
    $region9: #{tpu_custom_call.1} parent=1 // pred_fallthru
      _
    // Predicated region
    $region10: #{tpu_custom_call.1} parent=1 // pred_check
      _
    $region11: #{tpu_custom_call.1} parent=1 // pred_check_branch
      %47 = sbr.rel (0) target = $region13
    $region12: #{tpu_custom_call.1} parent=1 // pred_region
      %s49 = ssub.s32 256, 256
      %50 = vsyncadd [#allocation6], %s49
      %s51 = sshll.u32 [#allocation7], 4
      %s52 = int_to_ptr.vmem [resolvable:$true] %s51
      %57 = dma.hbm_to_vmem [thread:$0]  %s2, 256, %s52, [#allocation6], 64, 64, 4
    $region13: #{tpu_custom_call.1} parent=1 // pred_fallthru
      _
    // Predicated region
    $region14: #{tpu_custom_call.1} parent=1 // pred_check
      _
    $region15: #{tpu_custom_call.1} parent=1 // pred_check_branch
      %59 = sbr.rel (0) target = $region17
    $region16: #{tpu_custom_call.1} parent=1 // pred_region
      %s61 = ssub.s32 16, 16
      %62 = vsyncadd [#allocation9], %s61
      %s64 = sshll.u32 [#allocation8], 4
      %s65 = int_to_ptr.vmem [resolvable:$true] %s64
      %67 = dma.hbm_to_vmem [thread:$0]  %s3, 16, %s65, [#allocation9]
    $region17: #{tpu_custom_call.1} parent=1 // pred_fallthru
      _
    // Predicated region
    $region18: #{tpu_custom_call.1} parent=1 // pred_check
      _
    $region19: #{tpu_custom_call.1} parent=1 // pred_check_branch
      %69 = sbr.rel (0) target = $region21
    $region20: #{tpu_custom_call.1} parent=1 // pred_region
      %s71 = ssub.s32 256, 256
      %72 = vsyncadd [#allocation9], %s71
      %s73 = sshll.u32 [#allocation10], 4
      %s74 = int_to_ptr.vmem [resolvable:$true] %s73
      %79 = dma.hbm_to_vmem [thread:$0]  %s4, 256, %s74, [#allocation9], 64, 64, 4
    $region21: #{tpu_custom_call.1} parent=1 // pred_fallthru
      _
    // Predicated region
    $region22: #{tpu_custom_call.1} parent=1 // pred_check
      _
    $region23: #{tpu_custom_call.1} parent=1 // pred_check_branch
      %81 = sbr.rel (0) target = $region25
    $region24: #{tpu_custom_call.1} parent=1 // pred_region
      %s83 = ssub.s32 256, 256
      %84 = vsyncadd [#allocation12], %s83
      %s85 = sshll.u32 [#allocation11], 4
      %s86 = int_to_ptr.vmem [resolvable:$true] %s85
      %91 = dma.hbm_to_vmem [thread:$0]  %s5, 256, %s86, [#allocation12], 64, 64, 4
    $region25: #{tpu_custom_call.1} parent=1 // pred_fallthru
      _
    // Predicated region
    $region26: #{tpu_custom_call.1} parent=1 // pred_check
      _
    $region27: #{tpu_custom_call.1} parent=1 // pred_check_branch
      %93 = sbr.rel (0) target = $region29
    $region28: #{tpu_custom_call.1} parent=1 // pred_region
      %s95 = ssub.s32 16, 16
      %96 = vsyncadd [#allocation12], %s95
      %s98 = sshll.u32 [#allocation13], 4
      %s99 = int_to_ptr.vmem [resolvable:$true] %s98
      %101 = dma.hbm_to_vmem [thread:$0]  %s6, 16, %s99, [#allocation12]
    $region29: #{tpu_custom_call.1} parent=1 // pred_fallthru
      _
    // Predicated region
    $region30: #{tpu_custom_call.1} parent=1 // pred_check
      _
    $region31: #{tpu_custom_call.1} parent=1 // pred_check_branch
      %103 = sbr.rel (0) target = $region33
    $region32: #{tpu_custom_call.1} parent=1 // pred_region
      %s105 = ssub.s32 256, 256
      %106 = vsyncadd [#allocation15], %s105
      %s107 = sshll.u32 [#allocation14], 4
      %s108 = int_to_ptr.vmem [resolvable:$true] %s107
      %113 = dma.hbm_to_vmem [thread:$0]  %s7, 256, %s108, [#allocation15], 64, 64, 4
    $region33: #{tpu_custom_call.1} parent=1 // pred_fallthru
      _
    // Predicated region
    $region34: #{tpu_custom_call.1} parent=1 // pred_check
      _
    $region35: #{tpu_custom_call.1} parent=1 // pred_check_branch
      %115 = sbr.rel (0) target = $region37
    $region36: #{tpu_custom_call.1} parent=1 // pred_region
      %s117 = ssub.s32 16, 16
      %118 = vsyncadd [#allocation15], %s117
      %s120 = sshll.u32 [#allocation16], 4
      %s121 = int_to_ptr.vmem [resolvable:$true] %s120
      %123 = dma.hbm_to_vmem [thread:$0]  %s8, 16, %s121, [#allocation15]
    $region37: #{tpu_custom_call.1} parent=1 // pred_fallthru
      _
    // Predicated region
    $region38: #{tpu_custom_call.1} parent=1 // pred_check
      _
    $region39: #{tpu_custom_call.1} parent=1 // pred_check_branch
      %125 = sbr.rel (0) target = $region41
    $region40: #{tpu_custom_call.1} parent=1 // pred_region
      _
    $region41: #{tpu_custom_call.1} parent=1 // pred_fallthru
      _
    // Predicated region
    $region42: #{tpu_custom_call.1} parent=1 // pred_check
      _
    $region43: #{tpu_custom_call.1} parent=1 // pred_check_branch
      %127 = sbr.rel (0) target = $region45
    $region44: #{tpu_custom_call.1} parent=1 // pred_region
      _
    $region45: #{tpu_custom_call.1} parent=1 // pred_fallthru
      _
    // Predicated region
    $region46: #{tpu_custom_call.1} parent=1 // pred_check
      _
    $region47: #{tpu_custom_call.1} parent=1 // pred_check_branch
      %129 = sbr.rel (0) target = $region49
    $region48: #{tpu_custom_call.1} parent=1 // pred_region
      %130 = dma.done [#allocation3], 128
    $region49: #{tpu_custom_call.1} parent=1 // pred_fallthru
      _
    // Predicated region
    $region50: #{tpu_custom_call.1} parent=1 // pred_check
      _
    $region51: #{tpu_custom_call.1} parent=1 // pred_check_branch
      %132 = sbr.rel (0) target = $region53
    $region52: #{tpu_custom_call.1} parent=1 // pred_region
      %133 = dma.done [#allocation6], 256
    $region53: #{tpu_custom_call.1} parent=1 // pred_fallthru
      _
    // Predicated region
    $region54: #{tpu_custom_call.1} parent=1 // pred_check
      _
    $region55: #{tpu_custom_call.1} parent=1 // pred_check_branch
      %135 = sbr.rel (0) target = $region57
    $region56: #{tpu_custom_call.1} parent=1 // pred_region
      %136 = dma.done [#allocation6], 256
    $region57: #{tpu_custom_call.1} parent=1 // pred_fallthru
      _
    // Predicated region
    $region58: #{tpu_custom_call.1} parent=1 // pred_check
      _
    $region59: #{tpu_custom_call.1} parent=1 // pred_check_branch
      %138 = sbr.rel (0) target = $region61
    $region60: #{tpu_custom_call.1} parent=1 // pred_region
      %139 = dma.done [#allocation9], 16
    $region61: #{tpu_custom_call.1} parent=1 // pred_fallthru
      _
    // Predicated region
    $region62: #{tpu_custom_call.1} parent=1 // pred_check
      _
    $region63: #{tpu_custom_call.1} parent=1 // pred_check_branch
      %141 = sbr.rel (0) target = $region65
    $region64: #{tpu_custom_call.1} parent=1 // pred_region
      %142 = dma.done [#allocation9], 256
    $region65: #{tpu_custom_call.1} parent=1 // pred_fallthru
      _
    // Predicated region
    $region66: #{tpu_custom_call.1} parent=1 // pred_check
      _
    $region67: #{tpu_custom_call.1} parent=1 // pred_check_branch
      %144 = sbr.rel (0) target = $region69
    $region68: #{tpu_custom_call.1} parent=1 // pred_region
      %145 = dma.done [#allocation12], 256
    $region69: #{tpu_custom_call.1} parent=1 // pred_fallthru
      _
    // Predicated region
    $region70: #{tpu_custom_call.1} parent=1 // pred_check
      _
    $region71: #{tpu_custom_call.1} parent=1 // pred_check_branch
      %147 = sbr.rel (0) target = $region73
    $region72: #{tpu_custom_call.1} parent=1 // pred_region
      %148 = dma.done [#allocation12], 16
    $region73: #{tpu_custom_call.1} parent=1 // pred_fallthru
      _
    // Predicated region
    $region74: #{tpu_custom_call.1} parent=1 // pred_check
      _
    $region75: #{tpu_custom_call.1} parent=1 // pred_check_branch
      %150 = sbr.rel (0) target = $region77
    $region76: #{tpu_custom_call.1} parent=1 // pred_region
      %151 = dma.done [#allocation15], 256
    $region77: #{tpu_custom_call.1} parent=1 // pred_fallthru
      _
    // Predicated region
    $region78: #{tpu_custom_call.1} parent=1 // pred_check
      _
    $region79: #{tpu_custom_call.1} parent=1 // pred_check_branch
      %153 = sbr.rel (0) target = $region81
    $region80: #{tpu_custom_call.1} parent=1 // pred_region
      %154 = dma.done [#allocation15], 16
    $region81: #{tpu_custom_call.1} parent=1 // pred_fallthru
      _
    %v156 = vlaneseq
    %v157 = vand.u32 %v156, 127
    %vm158 = vcmp.lt.s32.totalorder %v157, 0
    %v159 = vsub.s32 0, %v157
    %v160 = vsel %vm158, %v159, %v157
    %v161 = vshrl.u32 %v160, 5
    %v162 = vand.u32 %v160, 31
    %v163 = vsub.s32 0, %v162
    %v164 = vsel %vm158, %v163, %v162
    %vm165 = vcmp.ne.s32.totalorder %v164, 0
    %vm166 = vcmp.lt.s32.totalorder %v164, 0
    %vm167 = vmand %vm166, %vm165
    %v168 = vadd.s32 %v164, 32
    %v169 = vsel %vm167, %v168, %v164
    %vm170 = vcmp.lt.s32.totalorder %v169, 16
    %v171 = vld [vmem:[#allocation2] sm:$0xf]
    %v172 = vld [vmem:[#allocation2 + $0x4] sm:$0xf]
    %v173 = vld [vmem:[#allocation5] sm:$0xf]
    %v174 = vld [vmem:[#allocation5 + $0x4] sm:$0xf]
    %v175 = vld [vmem:[#allocation5 + $0x8] sm:$0xf]
    %v176 = vld [vmem:[#allocation5 + $0xc] sm:$0xf]
    %v177 = vld [vmem:[#allocation8] sm:$0x1]
    %v179 = vlaneseq
    %v180 = vshrl.u32 %v179, 7
    %v181 = vsub.s32 0, %v180
    %v182 = vrot.slane %v177, %v181
    %v186 = vunpack.c.l.b16 %v171
    %v187 = vunpack.c.l.b16 %v172
    %v188 = vpack.c.b16 %v187, %v186
    %v193 = vunpack.c.l.b16 %v173
    %v194 = vunpack.c.l.b16 %v174
    %v195 = vunpack.c.l.b16 %v175
    %v196 = vunpack.c.l.b16 %v176
    %v197 = vpack.c.b16 %v194, %v193
    %v198 = vpack.c.b16 %v196, %v195
    %vm201 = vcmask 261120
    %v203 = vsel %vm201, %v188, 0
    %205 = vmatprep.subr.bf16.mxu0 0
    %206 = vmatpush1.bf16.msra.mxu0 0
    %207 = vmatprep.subr.bf16.mxu0 0
    %208 = vmatpush1.bf16.msra.mxu0 0
    %209 = vmatprep.subr.bf16.mxu0 0
    %210 = vmatpush1.bf16.msra.mxu0 0
    %211 = vmatprep.subr.bf16.mxu0 0
    %212 = vmatpush1.bf16.msra.mxu0 0
    %213 = vmatprep.subr.bf16.mxu0 0
    %214 = vmatpush1.bf16.msra.mxu0 0
    %215 = vmatprep.subr.bf16.mxu0 0
    %216 = vmatpush1.bf16.msra.mxu0 0
    %217 = vmatprep.subr.bf16.mxu0 0
    %218 = vmatpush1.bf16.msra.mxu0 %v198
    %219 = vmatprep.subr.bf16.mxu0 0
    %220 = vmatpush1.bf16.msra.mxu0 %v197
    %221 = vmatprep.subr.bf16.mxu0 0
    %222 = vmatpush2.bf16.msra.mxu0 0
    %223 = vmatprep.subr.bf16.mxu0 0
    %224 = vmatpush2.bf16.msra.mxu0 0
    %225 = vmatprep.subr.bf16.mxu0 0
    %226 = vmatpush2.bf16.msra.mxu0 0
    %227 = vmatprep.subr.bf16.mxu0 0
    %228 = vmatpush2.bf16.msra.mxu0 0
    %229 = vmatprep.subr.bf16.mxu0 0
    %230 = vmatpush2.bf16.msra.mxu0 0
    %231 = vmatprep.subr.bf16.mxu0 0
    %232 = vmatpush2.bf16.msra.mxu0 0
    %233 = vmatprep.subr.bf16.mxu0 0
    %234 = vmatpush2.bf16.msra.mxu0 0
    %235 = vmatprep.subr.bf16.mxu0 0
    %236 = vmatpush2.bf16.msra.mxu0 0
    %237 = vmatprep.mubr.bf16.mxu0 0
    %238 = vmatmul.mubr.bf16.gmra.mxu0 %v203
    %v239 = vpop.f32.mrf.mxu0
    %v240 = vadd.f32 %v182, %v239
    %v241 = vpop.f32.mrf.mxu0
    %v242 = vpop.f32.mrf.mxu0
    %v243 = vadd.f32 %v182, %v242
    %v244 = vpop.f32.mrf.mxu0
    %245 = vdwg.mxu0
    %v246 = vld [vmem:[#allocation7] sm:$0xf]
    %v247 = vld [vmem:[#allocation7 + $0x4] sm:$0xf]
    %v248 = vld [vmem:[#allocation7 + $0x8] sm:$0xf]
    %v249 = vld [vmem:[#allocation7 + $0xc] sm:$0xf]
    %v251 = vrot.slane %v243, 6
    %v253 = vsel %vm170, %v240, %v251
    %v258 = vunpack.c.l.b16 %v246
    %v259 = vunpack.c.l.b16 %v247
    %v260 = vunpack.c.l.b16 %v248
    %v261 = vunpack.c.l.b16 %v249
    %v262 = vpack.c.b16 %v259, %v258
    %v263 = vpack.c.b16 %v261, %v260
    %v267 = vsel %vm201, 0, 0
    %269 = vmatprep.subr.bf16.mxu0 0
    %270 = vmatpush1.bf16.msra.mxu0 0
    %271 = vmatprep.subr.bf16.mxu0 0
    %272 = vmatpush1.bf16.msra.mxu0 0
    %273 = vmatprep.subr.bf16.mxu0 0
    %274 = vmatpush1.bf16.msra.mxu0 0
    %275 = vmatprep.subr.bf16.mxu0 0
    %276 = vmatpush1.bf16.msra.mxu0 0
    %277 = vmatprep.subr.bf16.mxu0 0
    %278 = vmatpush1.bf16.msra.mxu0 0
    %279 = vmatprep.subr.bf16.mxu0 0
    %280 = vmatpush1.bf16.msra.mxu0 0
    %281 = vmatprep.subr.bf16.mxu0 0
    %282 = vmatpush1.bf16.msra.mxu0 %v263
    %283 = vmatprep.subr.bf16.mxu0 0
    %284 = vmatpush1.bf16.msra.mxu0 %v262
    %285 = vmatprep.subr.bf16.mxu0 0
    %286 = vmatpush2.bf16.msra.mxu0 0
    %287 = vmatprep.subr.bf16.mxu0 0
    %288 = vmatpush2.bf16.msra.mxu0 0
    %289 = vmatprep.subr.bf16.mxu0 0
    %290 = vmatpush2.bf16.msra.mxu0 0
    %291 = vmatprep.subr.bf16.mxu0 0
    %292 = vmatpush2.bf16.msra.mxu0 0
    %293 = vmatprep.subr.bf16.mxu0 0
    %294 = vmatpush2.bf16.msra.mxu0 0
    %295 = vmatprep.subr.bf16.mxu0 0
    %296 = vmatpush2.bf16.msra.mxu0 0
    %297 = vmatprep.subr.bf16.mxu0 0
    %298 = vmatpush2.bf16.msra.mxu0 0
    %299 = vmatprep.subr.bf16.mxu0 0
    %300 = vmatpush2.bf16.msra.mxu0 0
    %301 = vmatprep.mubr.bf16.mxu0 0
    %302 = vmatmul.mubr.bf16.gmra.mxu0 %v267
    %v303 = vpop.f32.mrf.mxu0
    %v304 = vadd.f32 0.0, %v303
    %v305 = vpop.f32.mrf.mxu0
    %v306 = vpop.f32.mrf.mxu0
    %v307 = vpop.f32.mrf.mxu0
    %308 = vdwg.mxu0
    %v309 = vadd.f32 %v253, %v304
    %v310 = vxor.u32 %v309, 2147483648
    %v311 = vmul.f32 %v310, 1.442695
    %v312 = vpow.pop %v311
    %v313 = vadd.f32 %v312, 1.0
    %v314 = vrcp.pop %v313
    %v315 = vmul.f32 1.0, %v314
    %v316 = vtanh.pop %v309
    %v317 = vmul.f32 %v315, 0.0
    %319 = vrot.lane.b32.xlu0 %v316, 64
    %v320 = vpop.permute.xlu0 %319
    %v322 = vmul.f32 %v315, %v320
    %324 = vrot.lane.b32.xlu0 %v322, 32
    %v325 = vpop.permute.xlu0 %324
    %v327 = vadd.f32 %v317, %v325
    %v328 = vtanh.pop %v327
    %330 = vrot.lane.b32.xlu0 %v328, 64
    %v331 = vpop.permute.xlu0 %330
    %v333 = vmul.f32 %v315, %v331
    %v334 = vrot.slane %v243, 2
    %v336 = vsel %vm170, %v240, %v334
    %v337 = vpack.c.bf16 %v333, %v333
    %339 = vrot.lane.b32.xlu0 %v337, 32
    %v340 = vpop.permute.xlu0 %339
    %v342 = vsel %vm201, %v340, 0
    %344 = vmatprep.subr.bf16.mxu0 0
    %345 = vmatpush1.bf16.msra.mxu0 0
    %346 = vmatprep.subr.bf16.mxu0 0
    %347 = vmatpush1.bf16.msra.mxu0 0
    %348 = vmatprep.subr.bf16.mxu0 0
    %349 = vmatpush1.bf16.msra.mxu0 0
    %350 = vmatprep.subr.bf16.mxu0 0
    %351 = vmatpush1.bf16.msra.mxu0 0
    %352 = vmatprep.subr.bf16.mxu0 0
    %353 = vmatpush1.bf16.msra.mxu0 0
    %354 = vmatprep.subr.bf16.mxu0 0
    %355 = vmatpush1.bf16.msra.mxu0 0
    %356 = vmatprep.subr.bf16.mxu0 0
    %357 = vmatpush1.bf16.msra.mxu0 %v263
    %358 = vmatprep.subr.bf16.mxu0 0
    %359 = vmatpush1.bf16.msra.mxu0 %v262
    %360 = vmatprep.subr.bf16.mxu0 0
    %361 = vmatpush2.bf16.msra.mxu0 0
    %362 = vmatprep.subr.bf16.mxu0 0
    %363 = vmatpush2.bf16.msra.mxu0 0
    %364 = vmatprep.subr.bf16.mxu0 0
    %365 = vmatpush2.bf16.msra.mxu0 0
    %366 = vmatprep.subr.bf16.mxu0 0
    %367 = vmatpush2.bf16.msra.mxu0 0
    %368 = vmatprep.subr.bf16.mxu0 0
    %369 = vmatpush2.bf16.msra.mxu0 0
    %370 = vmatprep.subr.bf16.mxu0 0
    %371 = vmatpush2.bf16.msra.mxu0 0
    %372 = vmatprep.subr.bf16.mxu0 0
    %373 = vmatpush2.bf16.msra.mxu0 0
    %374 = vmatprep.subr.bf16.mxu0 0
    %375 = vmatpush2.bf16.msra.mxu0 0
    %376 = vmatprep.mubr.bf16.mxu0 0
    %377 = vmatmul.mubr.bf16.gmra.mxu0 %v342
    %v378 = vpop.f32.mrf.mxu0
    %v379 = vadd.f32 0.0, %v378
    %v380 = vpop.f32.mrf.mxu0
    %v381 = vpop.f32.mrf.mxu0
    %v382 = vpop.f32.mrf.mxu0
    %383 = vdwg.mxu0
    %v385 = vrot.slane %v379, 6
    %v387 = vadd.f32 %v336, %v385
    %v388 = vxor.u32 %v387, 2147483648
    %v389 = vmul.f32 %v388, 1.442695
    %v390 = vpow.pop %v389
    %v391 = vadd.f32 %v390, 1.0
    %v392 = vrcp.pop %v391
    %v393 = vmul.f32 1.0, %v392
    %v394 = vtanh.pop %v387
    %v396 = vrot.slane %v327, 6
    %v398 = vmul.f32 %v393, %v396
    %400 = vrot.lane.b32.xlu0 %v394, 64
    %v401 = vpop.permute.xlu0 %400
    %v403 = vmul.f32 %v393, %v401
    %405 = vrot.lane.b32.xlu0 %v403, 32
    %v406 = vpop.permute.xlu0 %405
    %v408 = vadd.f32 %v398, %v406
    %v409 = vtanh.pop %v408
    %411 = vrot.lane.b32.xlu0 %v409, 64
    %v412 = vpop.permute.xlu0 %411
    %v414 = vmul.f32 %v393, %v412
    %v415 = vpack.c.bf16 %v414, %v414
    %v417 = vrot.slane %v415, 1
    %418 = vrot.lane.b32.xlu0 %v417, 32
    %v419 = vpop.permute.xlu0 %418
    %v421 = vsel %vm201, %v419, 0
    %423 = vmatprep.subr.bf16.mxu0 0
    %424 = vmatpush1.bf16.msra.mxu0 0
    %425 = vmatprep.subr.bf16.mxu0 0
    %426 = vmatpush1.bf16.msra.mxu0 0
    %427 = vmatprep.subr.bf16.mxu0 0
    %428 = vmatpush1.bf16.msra.mxu0 0
    %429 = vmatprep.subr.bf16.mxu0 0
    %430 = vmatpush1.bf16.msra.mxu0 0
    %431 = vmatprep.subr.bf16.mxu0 0
    %432 = vmatpush1.bf16.msra.mxu0 0
    %433 = vmatprep.subr.bf16.mxu0 0
    %434 = vmatpush1.bf16.msra.mxu0 0
    %435 = vmatprep.subr.bf16.mxu0 0
    %436 = vmatpush1.bf16.msra.mxu0 %v263
    %437 = vmatprep.subr.bf16.mxu0 0
    %438 = vmatpush1.bf16.msra.mxu0 %v262
    %439 = vmatprep.subr.bf16.mxu0 0
    %440 = vmatpush2.bf16.msra.mxu0 0
    %441 = vmatprep.subr.bf16.mxu0 0
    %442 = vmatpush2.bf16.msra.mxu0 0
    %443 = vmatprep.subr.bf16.mxu0 0
    %444 = vmatpush2.bf16.msra.mxu0 0
    %445 = vmatprep.subr.bf16.mxu0 0
    %446 = vmatpush2.bf16.msra.mxu0 0
    %447 = vmatprep.subr.bf16.mxu0 0
    %448 = vmatpush2.bf16.msra.mxu0 0
    %449 = vmatprep.subr.bf16.mxu0 0
    %450 = vmatpush2.bf16.msra.mxu0 0
    %451 = vmatprep.subr.bf16.mxu0 0
    %452 = vmatpush2.bf16.msra.mxu0 0
    %453 = vmatprep.subr.bf16.mxu0 0
    %454 = vmatpush2.bf16.msra.mxu0 0
    %455 = vmatprep.mubr.bf16.mxu0 0
    %456 = vmatmul.mubr.bf16.gmra.mxu0 %v421
    %v457 = vpop.f32.mrf.mxu0
    %v458 = vadd.f32 0.0, %v457
    %v459 = vpop.f32.mrf.mxu0
    %v460 = vpop.f32.mrf.mxu0
    %v461 = vpop.f32.mrf.mxu0
    %462 = vdwg.mxu0
    %v464 = vrot.slane %v458, 4
    %v466 = vadd.f32 %v253, %v464
    %v467 = vxor.u32 %v466, 2147483648
    %v468 = vmul.f32 %v467, 1.442695
    %v469 = vpow.pop %v468
    %v470 = vadd.f32 %v469, 1.0
    %v471 = vrcp.pop %v470
    %v472 = vmul.f32 1.0, %v471
    %v473 = vtanh.pop %v466
    %v475 = vrot.slane %v408, 6
    %v477 = vmul.f32 %v472, %v475
    %479 = vrot.lane.b32.xlu0 %v473, 64
    %v480 = vpop.permute.xlu0 %479
    %v482 = vmul.f32 %v472, %v480
    %484 = vrot.lane.b32.xlu0 %v482, 32
    %v485 = vpop.permute.xlu0 %484
    %v487 = vadd.f32 %v477, %v485
    %v488 = vtanh.pop %v487
    %490 = vrot.lane.b32.xlu0 %v488, 64
    %v491 = vpop.permute.xlu0 %490
    %v493 = vmul.f32 %v472, %v491
    %v494 = vpack.c.bf16 %v493, %v493
    %v496 = vrot.slane %v494, 2
    %497 = vrot.lane.b32.xlu0 %v496, 32
    %v498 = vpop.permute.xlu0 %497
    %v500 = vsel %vm201, %v498, 0
    %502 = vmatprep.subr.bf16.mxu0 0
    %503 = vmatpush1.bf16.msra.mxu0 0
    %504 = vmatprep.subr.bf16.mxu0 0
    %505 = vmatpush1.bf16.msra.mxu0 0
    %506 = vmatprep.subr.bf16.mxu0 0
    %507 = vmatpush1.bf16.msra.mxu0 0
    %508 = vmatprep.subr.bf16.mxu0 0
    %509 = vmatpush1.bf16.msra.mxu0 0
    %510 = vmatprep.subr.bf16.mxu0 0
    %511 = vmatpush1.bf16.msra.mxu0 0
    %512 = vmatprep.subr.bf16.mxu0 0
    %513 = vmatpush1.bf16.msra.mxu0 0
    %514 = vmatprep.subr.bf16.mxu0 0
    %515 = vmatpush1.bf16.msra.mxu0 %v263
    %516 = vmatprep.subr.bf16.mxu0 0
    %517 = vmatpush1.bf16.msra.mxu0 %v262
    %518 = vmatprep.subr.bf16.mxu0 0
    %519 = vmatpush2.bf16.msra.mxu0 0
    %520 = vmatprep.subr.bf16.mxu0 0
    %521 = vmatpush2.bf16.msra.mxu0 0
    %522 = vmatprep.subr.bf16.mxu0 0
    %523 = vmatpush2.bf16.msra.mxu0 0
    %524 = vmatprep.subr.bf16.mxu0 0
    %525 = vmatpush2.bf16.msra.mxu0 0
    %526 = vmatprep.subr.bf16.mxu0 0
    %527 = vmatpush2.bf16.msra.mxu0 0
    %528 = vmatprep.subr.bf16.mxu0 0
    %529 = vmatpush2.bf16.msra.mxu0 0
    %530 = vmatprep.subr.bf16.mxu0 0
    %531 = vmatpush2.bf16.msra.mxu0 0
    %532 = vmatprep.subr.bf16.mxu0 0
    %533 = vmatpush2.bf16.msra.mxu0 0
    %534 = vmatprep.mubr.bf16.mxu0 0
    %535 = vmatmul.mubr.bf16.gmra.mxu0 %v500
    %v536 = vpop.f32.mrf.mxu0
    %v537 = vadd.f32 0.0, %v536
    %v538 = vpop.f32.mrf.mxu0
    %v539 = vpop.f32.mrf.mxu0
    %v540 = vpop.f32.mrf.mxu0
    %541 = vdwg.mxu0
    %v543 = vrot.slane %v537, 2
    %v545 = vadd.f32 %v336, %v543
    %v546 = vxor.u32 %v545, 2147483648
    %v547 = vmul.f32 %v546, 1.442695
    %v548 = vpow.pop %v547
    %v549 = vadd.f32 %v548, 1.0
    %v550 = vrcp.pop %v549
    %v551 = vmul.f32 1.0, %v550
    %v552 = vtanh.pop %v545
    %v554 = vrot.slane %v487, 6
    %v556 = vmul.f32 %v551, %v554
    %558 = vrot.lane.b32.xlu0 %v552, 64
    %v559 = vpop.permute.xlu0 %558
    %v561 = vmul.f32 %v551, %v559
    %563 = vrot.lane.b32.xlu0 %v561, 32
    %v564 = vpop.permute.xlu0 %563
    %v566 = vadd.f32 %v556, %v564
    %v567 = vtanh.pop %v566
    %569 = vrot.lane.b32.xlu0 %v567, 64
    %v570 = vpop.permute.xlu0 %569
    %v572 = vmul.f32 %v551, %v570
    %v574 = vrot.slane %v240, 6
    %v576 = vsel %vm170, %v243, %v574
    %v577 = vpack.c.bf16 %v572, %v572
    %v579 = vrot.slane %v577, 3
    %580 = vrot.lane.b32.xlu0 %v579, 32
    %v581 = vpop.permute.xlu0 %580
    %v583 = vsel %vm201, %v581, 0
    %585 = vmatprep.subr.bf16.mxu0 0
    %586 = vmatpush1.bf16.msra.mxu0 0
    %587 = vmatprep.subr.bf16.mxu0 0
    %588 = vmatpush1.bf16.msra.mxu0 0
    %589 = vmatprep.subr.bf16.mxu0 0
    %590 = vmatpush1.bf16.msra.mxu0 0
    %591 = vmatprep.subr.bf16.mxu0 0
    %592 = vmatpush1.bf16.msra.mxu0 0
    %593 = vmatprep.subr.bf16.mxu0 0
    %594 = vmatpush1.bf16.msra.mxu0 0
    %595 = vmatprep.subr.bf16.mxu0 0
    %596 = vmatpush1.bf16.msra.mxu0 0
    %597 = vmatprep.subr.bf16.mxu0 0
    %598 = vmatpush1.bf16.msra.mxu0 %v263
    %599 = vmatprep.subr.bf16.mxu0 0
    %600 = vmatpush1.bf16.msra.mxu0 %v262
    %601 = vmatprep.subr.bf16.mxu0 0
    %602 = vmatpush2.bf16.msra.mxu0 0
    %603 = vmatprep.subr.bf16.mxu0 0
    %604 = vmatpush2.bf16.msra.mxu0 0
    %605 = vmatprep.subr.bf16.mxu0 0
    %606 = vmatpush2.bf16.msra.mxu0 0
    %607 = vmatprep.subr.bf16.mxu0 0
    %608 = vmatpush2.bf16.msra.mxu0 0
    %609 = vmatprep.subr.bf16.mxu0 0
    %610 = vmatpush2.bf16.msra.mxu0 0
    %611 = vmatprep.subr.bf16.mxu0 0
    %612 = vmatpush2.bf16.msra.mxu0 0
    %613 = vmatprep.subr.bf16.mxu0 0
    %614 = vmatpush2.bf16.msra.mxu0 0
    %615 = vmatprep.subr.bf16.mxu0 0
    %616 = vmatpush2.bf16.msra.mxu0 0
    %617 = vmatprep.mubr.bf16.mxu0 0
    %618 = vmatmul.mubr.bf16.gmra.mxu0 %v583
    %v619 = vpop.f32.mrf.mxu0
    %v620 = vadd.f32 0.0, %v619
    %v621 = vpop.f32.mrf.mxu0
    %v622 = vpop.f32.mrf.mxu0
    %v623 = vpop.f32.mrf.mxu0
    %624 = vdwg.mxu0
    %v625 = vadd.f32 %v576, %v620
    %v626 = vxor.u32 %v625, 2147483648
    %v627 = vmul.f32 %v626, 1.442695
    %v628 = vpow.pop %v627
    %v629 = vadd.f32 %v628, 1.0
    %v630 = vrcp.pop %v629
    %v631 = vmul.f32 1.0, %v630
    %v632 = vtanh.pop %v625
    %v634 = vrot.slane %v566, 6
    %v636 = vmul.f32 %v631, %v634
    %638 = vrot.lane.b32.xlu0 %v632, 64
    %v639 = vpop.permute.xlu0 %638
    %v641 = vmul.f32 %v631, %v639
    %643 = vrot.lane.b32.xlu0 %v641, 32
    %v644 = vpop.permute.xlu0 %643
    %v646 = vadd.f32 %v636, %v644
    %v647 = vtanh.pop %v646
    %649 = vrot.lane.b32.xlu0 %v647, 64
    %v650 = vpop.permute.xlu0 %649
    %v652 = vmul.f32 %v631, %v650
    %v653 = vrot.slane %v240, 2
    %v655 = vsel %vm170, %v243, %v653
    %v656 = vpack.c.bf16 %v652, %v652
    %658 = vrot.lane.b32.xlu0 %v656, 32
    %v659 = vpop.permute.xlu0 %658
    %v661 = vsel %vm201, %v659, 0
    %663 = vmatprep.subr.bf16.mxu0 0
    %664 = vmatpush1.bf16.msra.mxu0 0
    %665 = vmatprep.subr.bf16.mxu0 0
    %666 = vmatpush1.bf16.msra.mxu0 0
    %667 = vmatprep.subr.bf16.mxu0 0
    %668 = vmatpush1.bf16.msra.mxu0 0
    %669 = vmatprep.subr.bf16.mxu0 0
    %670 = vmatpush1.bf16.msra.mxu0 0
    %671 = vmatprep.subr.bf16.mxu0 0
    %672 = vmatpush1.bf16.msra.mxu0 0
    %673 = vmatprep.subr.bf16.mxu0 0
    %674 = vmatpush1.bf16.msra.mxu0 0
    %675 = vmatprep.subr.bf16.mxu0 0
    %676 = vmatpush1.bf16.msra.mxu0 %v263
    %677 = vmatprep.subr.bf16.mxu0 0
    %678 = vmatpush1.bf16.msra.mxu0 %v262
    %679 = vmatprep.subr.bf16.mxu0 0
    %680 = vmatpush2.bf16.msra.mxu0 0
    %681 = vmatprep.subr.bf16.mxu0 0
    %682 = vmatpush2.bf16.msra.mxu0 0
    %683 = vmatprep.subr.bf16.mxu0 0
    %684 = vmatpush2.bf16.msra.mxu0 0
    %685 = vmatprep.subr.bf16.mxu0 0
    %686 = vmatpush2.bf16.msra.mxu0 0
    %687 = vmatprep.subr.bf16.mxu0 0
    %688 = vmatpush2.bf16.msra.mxu0 0
    %689 = vmatprep.subr.bf16.mxu0 0
    %690 = vmatpush2.bf16.msra.mxu0 0
    %691 = vmatprep.subr.bf16.mxu0 0
    %692 = vmatpush2.bf16.msra.mxu0 0
    %693 = vmatprep.subr.bf16.mxu0 0
    %694 = vmatpush2.bf16.msra.mxu0 0
    %695 = vmatprep.mubr.bf16.mxu0 0
    %696 = vmatmul.mubr.bf16.gmra.mxu0 %v661
    %v697 = vpop.f32.mrf.mxu0
    %v698 = vadd.f32 0.0, %v697
    %v699 = vpop.f32.mrf.mxu0
    %v700 = vpop.f32.mrf.mxu0
    %v701 = vpop.f32.mrf.mxu0
    %702 = vdwg.mxu0
    %v704 = vrot.slane %v698, 6
    %v706 = vadd.f32 %v655, %v704
    %v707 = vxor.u32 %v706, 2147483648
    %v708 = vmul.f32 %v707, 1.442695
    %v709 = vpow.pop %v708
    %v710 = vadd.f32 %v709, 1.0
    %v711 = vrcp.pop %v710
    %v712 = vmul.f32 1.0, %v711
    %v713 = vtanh.pop %v706
    %v715 = vrot.slane %v646, 6
    %v717 = vmul.f32 %v712, %v715
    %719 = vrot.lane.b32.xlu0 %v713, 64
    %v720 = vpop.permute.xlu0 %719
    %v722 = vmul.f32 %v712, %v720
    %724 = vrot.lane.b32.xlu0 %v722, 32
    %v725 = vpop.permute.xlu0 %724
    %v727 = vadd.f32 %v717, %v725
    %v728 = vtanh.pop %v727
    %730 = vrot.lane.b32.xlu0 %v728, 64
    %v731 = vpop.permute.xlu0 %730
    %v733 = vmul.f32 %v712, %v731
    %v734 = vpack.c.bf16 %v733, %v733
    %v736 = vrot.slane %v734, 1
    %737 = vrot.lane.b32.xlu0 %v736, 32
    %v738 = vpop.permute.xlu0 %737
    %v740 = vsel %vm201, %v738, 0
    %742 = vmatprep.subr.bf16.mxu0 0
    %743 = vmatpush1.bf16.msra.mxu0 0
    %744 = vmatprep.subr.bf16.mxu0 0
    %745 = vmatpush1.bf16.msra.mxu0 0
    %746 = vmatprep.subr.bf16.mxu0 0
    %747 = vmatpush1.bf16.msra.mxu0 0
    %748 = vmatprep.subr.bf16.mxu0 0
    %749 = vmatpush1.bf16.msra.mxu0 0
    %750 = vmatprep.subr.bf16.mxu0 0
    %751 = vmatpush1.bf16.msra.mxu0 0
    %752 = vmatprep.subr.bf16.mxu0 0
    %753 = vmatpush1.bf16.msra.mxu0 0
    %754 = vmatprep.subr.bf16.mxu0 0
    %755 = vmatpush1.bf16.msra.mxu0 %v263
    %756 = vmatprep.subr.bf16.mxu0 0
    %757 = vmatpush1.bf16.msra.mxu0 %v262
    %758 = vmatprep.subr.bf16.mxu0 0
    %759 = vmatpush2.bf16.msra.mxu0 0
    %760 = vmatprep.subr.bf16.mxu0 0
    %761 = vmatpush2.bf16.msra.mxu0 0
    %762 = vmatprep.subr.bf16.mxu0 0
    %763 = vmatpush2.bf16.msra.mxu0 0
    %764 = vmatprep.subr.bf16.mxu0 0
    %765 = vmatpush2.bf16.msra.mxu0 0
    %766 = vmatprep.subr.bf16.mxu0 0
    %767 = vmatpush2.bf16.msra.mxu0 0
    %768 = vmatprep.subr.bf16.mxu0 0
    %769 = vmatpush2.bf16.msra.mxu0 0
    %770 = vmatprep.subr.bf16.mxu0 0
    %771 = vmatpush2.bf16.msra.mxu0 0
    %772 = vmatprep.subr.bf16.mxu0 0
    %773 = vmatpush2.bf16.msra.mxu0 0
    %774 = vmatprep.mubr.bf16.mxu0 0
    %775 = vmatmul.mubr.bf16.gmra.mxu0 %v740
    %v776 = vpop.f32.mrf.mxu0
    %v777 = vadd.f32 0.0, %v776
    %v778 = vpop.f32.mrf.mxu0
    %v779 = vpop.f32.mrf.mxu0
    %v780 = vpop.f32.mrf.mxu0
    %781 = vdwg.mxu0
    %v783 = vrot.slane %v777, 4
    %v785 = vadd.f32 %v576, %v783
    %v786 = vxor.u32 %v785, 2147483648
    %v787 = vmul.f32 %v786, 1.442695
    %v788 = vpow.pop %v787
    %v789 = vadd.f32 %v788, 1.0
    %v790 = vrcp.pop %v789
    %v791 = vmul.f32 1.0, %v790
    %v792 = vtanh.pop %v785
    %v794 = vrot.slane %v727, 6
    %v796 = vmul.f32 %v791, %v794
    %798 = vrot.lane.b32.xlu0 %v792, 64
    %v799 = vpop.permute.xlu0 %798
    %v801 = vmul.f32 %v791, %v799
    %803 = vrot.lane.b32.xlu0 %v801, 32
    %v804 = vpop.permute.xlu0 %803
    %v806 = vadd.f32 %v796, %v804
    %v807 = vtanh.pop %v806
    %809 = vrot.lane.b32.xlu0 %v807, 64
    %v810 = vpop.permute.xlu0 %809
    %v812 = vmul.f32 %v791, %v810
    %v813 = vpack.c.bf16 %v812, %v812
    %v815 = vrot.slane %v813, 2
    %816 = vrot.lane.b32.xlu0 %v815, 32
    %v817 = vpop.permute.xlu0 %816
    %v819 = vsel %vm201, %v817, 0
    %821 = vmatprep.subr.bf16.mxu0 0
    %822 = vmatpush1.bf16.msra.mxu0 0
    %823 = vmatprep.subr.bf16.mxu0 0
    %824 = vmatpush1.bf16.msra.mxu0 0
    %825 = vmatprep.subr.bf16.mxu0 0
    %826 = vmatpush1.bf16.msra.mxu0 0
    %827 = vmatprep.subr.bf16.mxu0 0
    %828 = vmatpush1.bf16.msra.mxu0 0
    %829 = vmatprep.subr.bf16.mxu0 0
    %830 = vmatpush1.bf16.msra.mxu0 0
    %831 = vmatprep.subr.bf16.mxu0 0
    %832 = vmatpush1.bf16.msra.mxu0 0
    %833 = vmatprep.subr.bf16.mxu0 0
    %834 = vmatpush1.bf16.msra.mxu0 %v263
    %835 = vmatprep.subr.bf16.mxu0 0
    %836 = vmatpush1.bf16.msra.mxu0 %v262
    %837 = vmatprep.subr.bf16.mxu0 0
    %838 = vmatpush2.bf16.msra.mxu0 0
    %839 = vmatprep.subr.bf16.mxu0 0
    %840 = vmatpush2.bf16.msra.mxu0 0
    %841 = vmatprep.subr.bf16.mxu0 0
    %842 = vmatpush2.bf16.msra.mxu0 0
    %843 = vmatprep.subr.bf16.mxu0 0
    %844 = vmatpush2.bf16.msra.mxu0 0
    %845 = vmatprep.subr.bf16.mxu0 0
    %846 = vmatpush2.bf16.msra.mxu0 0
    %847 = vmatprep.subr.bf16.mxu0 0
    %848 = vmatpush2.bf16.msra.mxu0 0
    %849 = vmatprep.subr.bf16.mxu0 0
    %850 = vmatpush2.bf16.msra.mxu0 0
    %851 = vmatprep.subr.bf16.mxu0 0
    %852 = vmatpush2.bf16.msra.mxu0 0
    %853 = vmatprep.mubr.bf16.mxu0 0
    %854 = vmatmul.mubr.bf16.gmra.mxu0 %v819
    %v855 = vpop.f32.mrf.mxu0
    %v856 = vadd.f32 0.0, %v855
    %v857 = vpop.f32.mrf.mxu0
    %v858 = vpop.f32.mrf.mxu0
    %v859 = vpop.f32.mrf.mxu0
    %860 = vdwg.mxu0
    %v862 = vrot.slane %v856, 2
    %v864 = vadd.f32 %v655, %v862
    %v865 = vxor.u32 %v864, 2147483648
    %v866 = vmul.f32 %v865, 1.442695
    %v867 = vpow.pop %v866
    %v868 = vadd.f32 %v867, 1.0
    %v869 = vrcp.pop %v868
    %v870 = vmul.f32 1.0, %v869
    %v871 = vtanh.pop %v864
    %v873 = vrot.slane %v806, 6
    %v875 = vmul.f32 %v870, %v873
    %877 = vrot.lane.b32.xlu0 %v871, 64
    %v878 = vpop.permute.xlu0 %877
    %v880 = vmul.f32 %v870, %v878
    %882 = vrot.lane.b32.xlu0 %v880, 32
    %v883 = vpop.permute.xlu0 %882
    %v885 = vadd.f32 %v875, %v883
    %v886 = vtanh.pop %v885
    %888 = vrot.lane.b32.xlu0 %v886, 64
    %v889 = vpop.permute.xlu0 %888
    %v891 = vmul.f32 %v870, %v889
    %vm892 = vcmask 1041408
    %v893 = vsel %vm892, %v333, %v414
    %vm894 = vcmask 1043456
    %v895 = vsel %vm894, %v893, %v493
    %vm896 = vcmask 1045504
    %v897 = vsel %vm896, %v895, %v572
    %v898 = vsel %vm892, %v652, %v733
    %v899 = vsel %vm894, %v898, %v812
    %v900 = vsel %vm896, %v899, %v891
    %v902 = vrot.slane %v891, 6
    %v905 = vrot.slane %v812, 2
    %v908 = vrot.slane %v733, 6
    %v911 = vrot.slane %v652, 2
    %v914 = vrot.slane %v572, 6
    %v917 = vrot.slane %v493, 2
    %v920 = vrot.slane %v414, 6
    %v923 = vrot.slane %v333, 2
    %v925 = vsel %vm892, %v902, %v905
    %v926 = vsel %vm894, %v925, %v908
    %v927 = vsel %vm896, %v926, %v911
    %v928 = vsel %vm892, %v914, %v917
    %v929 = vsel %vm894, %v928, %v920
    %v930 = vsel %vm896, %v929, %v923
    %933 = vrot.lane.b32.xlu0 %v897, 32
    %v934 = vpop.permute.xlu0 %933
    %935 = vrot.lane.b32.xlu0 %v900, 32
    %v936 = vpop.permute.xlu0 %935
    %941 = vrot.lane.b32.xlu0 %v927, 32
    %v942 = vpop.permute.xlu0 %941
    %943 = vrot.lane.b32.xlu0 %v930, 32
    %v944 = vpop.permute.xlu0 %943
    %vm947 = vcmask 130048
    %v948 = vsel %vm947, %v934, %v942
    %v949 = vsel %vm947, %v936, %v944
    %v950 = vpack.c.bf16 %v949, %v948
    %v951 = vld [vmem:[#allocation10] sm:$0xf]
    %v952 = vld [vmem:[#allocation10 + $0x4] sm:$0xf]
    %v953 = vld [vmem:[#allocation10 + $0x8] sm:$0xf]
    %v954 = vld [vmem:[#allocation10 + $0xc] sm:$0xf]
    %v955 = vld [vmem:[#allocation13] sm:$0x1]
    %v957 = vlaneseq
    %v958 = vshrl.u32 %v957, 7
    %v959 = vsub.s32 0, %v958
    %v960 = vrot.slane %v955, %v959
    %v966 = vunpack.c.l.b16 %v951
    %v967 = vunpack.c.l.b16 %v952
    %v968 = vunpack.c.l.b16 %v953
    %v969 = vunpack.c.l.b16 %v954
    %v970 = vpack.c.b16 %v967, %v966
    %v971 = vpack.c.b16 %v969, %v968
    %v975 = vsel %vm201, %v950, 0
    %977 = vmatprep.subr.bf16.mxu0 0
    %978 = vmatpush1.bf16.msra.mxu0 0
    %979 = vmatprep.subr.bf16.mxu0 0
    %980 = vmatpush1.bf16.msra.mxu0 0
    %981 = vmatprep.subr.bf16.mxu0 0
    %982 = vmatpush1.bf16.msra.mxu0 0
    %983 = vmatprep.subr.bf16.mxu0 0
    %984 = vmatpush1.bf16.msra.mxu0 0
    %985 = vmatprep.subr.bf16.mxu0 0
    %986 = vmatpush1.bf16.msra.mxu0 0
    %987 = vmatprep.subr.bf16.mxu0 0
    %988 = vmatpush1.bf16.msra.mxu0 0
    %989 = vmatprep.subr.bf16.mxu0 0
    %990 = vmatpush1.bf16.msra.mxu0 %v971
    %991 = vmatprep.subr.bf16.mxu0 0
    %992 = vmatpush1.bf16.msra.mxu0 %v970
    %993 = vmatprep.subr.bf16.mxu0 0
    %994 = vmatpush2.bf16.msra.mxu0 0
    %995 = vmatprep.subr.bf16.mxu0 0
    %996 = vmatpush2.bf16.msra.mxu0 0
    %997 = vmatprep.subr.bf16.mxu0 0
    %998 = vmatpush2.bf16.msra.mxu0 0
    %999 = vmatprep.subr.bf16.mxu0 0
    %1000 = vmatpush2.bf16.msra.mxu0 0
    %1001 = vmatprep.subr.bf16.mxu0 0
    %1002 = vmatpush2.bf16.msra.mxu0 0
    %1003 = vmatprep.subr.bf16.mxu0 0
    %1004 = vmatpush2.bf16.msra.mxu0 0
    %1005 = vmatprep.subr.bf16.mxu0 0
    %1006 = vmatpush2.bf16.msra.mxu0 0
    %1007 = vmatprep.subr.bf16.mxu0 0
    %1008 = vmatpush2.bf16.msra.mxu0 0
    %1009 = vmatprep.mubr.bf16.mxu0 0
    %1010 = vmatmul.mubr.bf16.gmra.mxu0 %v975
    %v1011 = vpop.f32.mrf.mxu0
    %v1012 = vadd.f32 %v960, %v1011
    %v1013 = vpop.f32.mrf.mxu0
    %v1014 = vpop.f32.mrf.mxu0
    %v1015 = vadd.f32 %v960, %v1014
    %v1016 = vpop.f32.mrf.mxu0
    %1017 = vdwg.mxu0
    %v1018 = vld [vmem:[#allocation11] sm:$0xf]
    %v1019 = vld [vmem:[#allocation11 + $0x4] sm:$0xf]
    %v1020 = vld [vmem:[#allocation11 + $0x8] sm:$0xf]
    %v1021 = vld [vmem:[#allocation11 + $0xc] sm:$0xf]
    %v1023 = vrot.slane %v1015, 6
    %v1025 = vsel %vm170, %v1012, %v1023
    %v1030 = vunpack.c.l.b16 %v1018
    %v1031 = vunpack.c.l.b16 %v1019
    %v1032 = vunpack.c.l.b16 %v1020
    %v1033 = vunpack.c.l.b16 %v1021
    %v1034 = vpack.c.b16 %v1031, %v1030
    %v1035 = vpack.c.b16 %v1033, %v1032
    %1038 = vmatprep.subr.bf16.mxu0 0
    %1039 = vmatpush1.bf16.msra.mxu0 0
    %1040 = vmatprep.subr.bf16.mxu0 0
    %1041 = vmatpush1.bf16.msra.mxu0 0
    %1042 = vmatprep.subr.bf16.mxu0 0
    %1043 = vmatpush1.bf16.msra.mxu0 0
    %1044 = vmatprep.subr.bf16.mxu0 0
    %1045 = vmatpush1.bf16.msra.mxu0 0
    %1046 = vmatprep.subr.bf16.mxu0 0
    %1047 = vmatpush1.bf16.msra.mxu0 0
    %1048 = vmatprep.subr.bf16.mxu0 0
    %1049 = vmatpush1.bf16.msra.mxu0 0
    %1050 = vmatprep.subr.bf16.mxu0 0
    %1051 = vmatpush1.bf16.msra.mxu0 %v1035
    %1052 = vmatprep.subr.bf16.mxu0 0
    %1053 = vmatpush1.bf16.msra.mxu0 %v1034
    %1054 = vmatprep.subr.bf16.mxu0 0
    %1055 = vmatpush2.bf16.msra.mxu0 0
    %1056 = vmatprep.subr.bf16.mxu0 0
    %1057 = vmatpush2.bf16.msra.mxu0 0
    %1058 = vmatprep.subr.bf16.mxu0 0
    %1059 = vmatpush2.bf16.msra.mxu0 0
    %1060 = vmatprep.subr.bf16.mxu0 0
    %1061 = vmatpush2.bf16.msra.mxu0 0
    %1062 = vmatprep.subr.bf16.mxu0 0
    %1063 = vmatpush2.bf16.msra.mxu0 0
    %1064 = vmatprep.subr.bf16.mxu0 0
    %1065 = vmatpush2.bf16.msra.mxu0 0
    %1066 = vmatprep.subr.bf16.mxu0 0
    %1067 = vmatpush2.bf16.msra.mxu0 0
    %1068 = vmatprep.subr.bf16.mxu0 0
    %1069 = vmatpush2.bf16.msra.mxu0 0
    %1070 = vmatprep.mubr.bf16.mxu0 0
    %1071 = vmatmul.mubr.bf16.gmra.mxu0 %v267
    %v1072 = vpop.f32.mrf.mxu0
    %v1073 = vadd.f32 0.0, %v1072
    %v1074 = vpop.f32.mrf.mxu0
    %v1075 = vpop.f32.mrf.mxu0
    %v1076 = vpop.f32.mrf.mxu0
    %1077 = vdwg.mxu0
    %v1078 = vadd.f32 %v1025, %v1073
    %v1079 = vxor.u32 %v1078, 2147483648
    %v1080 = vmul.f32 %v1079, 1.442695
    %v1081 = vpow.pop %v1080
    %v1082 = vadd.f32 %v1081, 1.0
    %v1083 = vrcp.pop %v1082
    %v1084 = vmul.f32 1.0, %v1083
    %v1085 = vtanh.pop %v1078
    %v1086 = vmul.f32 %v1084, 0.0
    %1088 = vrot.lane.b32.xlu0 %v1085, 64
    %v1089 = vpop.permute.xlu0 %1088
    %v1091 = vmul.f32 %v1084, %v1089
    %1093 = vrot.lane.b32.xlu0 %v1091, 32
    %v1094 = vpop.permute.xlu0 %1093
    %v1096 = vadd.f32 %v1086, %v1094
    %v1097 = vtanh.pop %v1096
    %1099 = vrot.lane.b32.xlu0 %v1097, 64
    %v1100 = vpop.permute.xlu0 %1099
    %v1102 = vmul.f32 %v1084, %v1100
    %v1103 = vrot.slane %v1015, 2
    %v1105 = vsel %vm170, %v1012, %v1103
    %v1106 = vpack.c.bf16 %v1102, %v1102
    %1108 = vrot.lane.b32.xlu0 %v1106, 32
    %v1109 = vpop.permute.xlu0 %1108
    %v1111 = vsel %vm201, %v1109, 0
    %1113 = vmatprep.subr.bf16.mxu0 0
    %1114 = vmatpush1.bf16.msra.mxu0 0
    %1115 = vmatprep.subr.bf16.mxu0 0
    %1116 = vmatpush1.bf16.msra.mxu0 0
    %1117 = vmatprep.subr.bf16.mxu0 0
    %1118 = vmatpush1.bf16.msra.mxu0 0
    %1119 = vmatprep.subr.bf16.mxu0 0
    %1120 = vmatpush1.bf16.msra.mxu0 0
    %1121 = vmatprep.subr.bf16.mxu0 0
    %1122 = vmatpush1.bf16.msra.mxu0 0
    %1123 = vmatprep.subr.bf16.mxu0 0
    %1124 = vmatpush1.bf16.msra.mxu0 0
    %1125 = vmatprep.subr.bf16.mxu0 0
    %1126 = vmatpush1.bf16.msra.mxu0 %v1035
    %1127 = vmatprep.subr.bf16.mxu0 0
    %1128 = vmatpush1.bf16.msra.mxu0 %v1034
    %1129 = vmatprep.subr.bf16.mxu0 0
    %1130 = vmatpush2.bf16.msra.mxu0 0
    %1131 = vmatprep.subr.bf16.mxu0 0
    %1132 = vmatpush2.bf16.msra.mxu0 0
    %1133 = vmatprep.subr.bf16.mxu0 0
    %1134 = vmatpush2.bf16.msra.mxu0 0
    %1135 = vmatprep.subr.bf16.mxu0 0
    %1136 = vmatpush2.bf16.msra.mxu0 0
    %1137 = vmatprep.subr.bf16.mxu0 0
    %1138 = vmatpush2.bf16.msra.mxu0 0
    %1139 = vmatprep.subr.bf16.mxu0 0
    %1140 = vmatpush2.bf16.msra.mxu0 0
    %1141 = vmatprep.subr.bf16.mxu0 0
    %1142 = vmatpush2.bf16.msra.mxu0 0
    %1143 = vmatprep.subr.bf16.mxu0 0
    %1144 = vmatpush2.bf16.msra.mxu0 0
    %1145 = vmatprep.mubr.bf16.mxu0 0
    %1146 = vmatmul.mubr.bf16.gmra.mxu0 %v1111
    %v1147 = vpop.f32.mrf.mxu0
    %v1148 = vadd.f32 0.0, %v1147
    %v1149 = vpop.f32.mrf.mxu0
    %v1150 = vpop.f32.mrf.mxu0
    %v1151 = vpop.f32.mrf.mxu0
    %1152 = vdwg.mxu0
    %v1154 = vrot.slane %v1148, 6
    %v1156 = vadd.f32 %v1105, %v1154
    %v1157 = vxor.u32 %v1156, 2147483648
    %v1158 = vmul.f32 %v1157, 1.442695
    %v1159 = vpow.pop %v1158
    %v1160 = vadd.f32 %v1159, 1.0
    %v1161 = vrcp.pop %v1160
    %v1162 = vmul.f32 1.0, %v1161
    %v1163 = vtanh.pop %v1156
    %v1165 = vrot.slane %v1096, 6
    %v1167 = vmul.f32 %v1162, %v1165
    %1169 = vrot.lane.b32.xlu0 %v1163, 64
    %v1170 = vpop.permute.xlu0 %1169
    %v1172 = vmul.f32 %v1162, %v1170
    %1174 = vrot.lane.b32.xlu0 %v1172, 32
    %v1175 = vpop.permute.xlu0 %1174
    %v1177 = vadd.f32 %v1167, %v1175
    %v1178 = vtanh.pop %v1177
    %1180 = vrot.lane.b32.xlu0 %v1178, 64
    %v1181 = vpop.permute.xlu0 %1180
    %v1183 = vmul.f32 %v1162, %v1181
    %v1184 = vpack.c.bf16 %v1183, %v1183
    %v1186 = vrot.slane %v1184, 1
    %1187 = vrot.lane.b32.xlu0 %v1186, 32
    %v1188 = vpop.permute.xlu0 %1187
    %v1190 = vsel %vm201, %v1188, 0
    %1192 = vmatprep.subr.bf16.mxu0 0
    %1193 = vmatpush1.bf16.msra.mxu0 0
    %1194 = vmatprep.subr.bf16.mxu0 0
    %1195 = vmatpush1.bf16.msra.mxu0 0
    %1196 = vmatprep.subr.bf16.mxu0 0
    %1197 = vmatpush1.bf16.msra.mxu0 0
    %1198 = vmatprep.subr.bf16.mxu0 0
    %1199 = vmatpush1.bf16.msra.mxu0 0
    %1200 = vmatprep.subr.bf16.mxu0 0
    %1201 = vmatpush1.bf16.msra.mxu0 0
    %1202 = vmatprep.subr.bf16.mxu0 0
    %1203 = vmatpush1.bf16.msra.mxu0 0
    %1204 = vmatprep.subr.bf16.mxu0 0
    %1205 = vmatpush1.bf16.msra.mxu0 %v1035
    %1206 = vmatprep.subr.bf16.mxu0 0
    %1207 = vmatpush1.bf16.msra.mxu0 %v1034
    %1208 = vmatprep.subr.bf16.mxu0 0
    %1209 = vmatpush2.bf16.msra.mxu0 0
    %1210 = vmatprep.subr.bf16.mxu0 0
    %1211 = vmatpush2.bf16.msra.mxu0 0
    %1212 = vmatprep.subr.bf16.mxu0 0
    %1213 = vmatpush2.bf16.msra.mxu0 0
    %1214 = vmatprep.subr.bf16.mxu0 0
    %1215 = vmatpush2.bf16.msra.mxu0 0
    %1216 = vmatprep.subr.bf16.mxu0 0
    %1217 = vmatpush2.bf16.msra.mxu0 0
    %1218 = vmatprep.subr.bf16.mxu0 0
    %1219 = vmatpush2.bf16.msra.mxu0 0
    %1220 = vmatprep.subr.bf16.mxu0 0
    %1221 = vmatpush2.bf16.msra.mxu0 0
    %1222 = vmatprep.subr.bf16.mxu0 0
    %1223 = vmatpush2.bf16.msra.mxu0 0
    %1224 = vmatprep.mubr.bf16.mxu0 0
    %1225 = vmatmul.mubr.bf16.gmra.mxu0 %v1190
    %v1226 = vpop.f32.mrf.mxu0
    %v1227 = vadd.f32 0.0, %v1226
    %v1228 = vpop.f32.mrf.mxu0
    %v1229 = vpop.f32.mrf.mxu0
    %v1230 = vpop.f32.mrf.mxu0
    %1231 = vdwg.mxu0
    %v1233 = vrot.slane %v1227, 4
    %v1235 = vadd.f32 %v1025, %v1233
    %v1236 = vxor.u32 %v1235, 2147483648
    %v1237 = vmul.f32 %v1236, 1.442695
    %v1238 = vpow.pop %v1237
    %v1239 = vadd.f32 %v1238, 1.0
    %v1240 = vrcp.pop %v1239
    %v1241 = vmul.f32 1.0, %v1240
    %v1242 = vtanh.pop %v1235
    %v1244 = vrot.slane %v1177, 6
    %v1246 = vmul.f32 %v1241, %v1244
    %1248 = vrot.lane.b32.xlu0 %v1242, 64
    %v1249 = vpop.permute.xlu0 %1248
    %v1251 = vmul.f32 %v1241, %v1249
    %1253 = vrot.lane.b32.xlu0 %v1251, 32
    %v1254 = vpop.permute.xlu0 %1253
    %v1256 = vadd.f32 %v1246, %v1254
    %v1257 = vtanh.pop %v1256
    %1259 = vrot.lane.b32.xlu0 %v1257, 64
    %v1260 = vpop.permute.xlu0 %1259
    %v1262 = vmul.f32 %v1241, %v1260
    %v1263 = vpack.c.bf16 %v1262, %v1262
    %v1265 = vrot.slane %v1263, 2
    %1266 = vrot.lane.b32.xlu0 %v1265, 32
    %v1267 = vpop.permute.xlu0 %1266
    %v1269 = vsel %vm201, %v1267, 0
    %1271 = vmatprep.subr.bf16.mxu0 0
    %1272 = vmatpush1.bf16.msra.mxu0 0
    %1273 = vmatprep.subr.bf16.mxu0 0
    %1274 = vmatpush1.bf16.msra.mxu0 0
    %1275 = vmatprep.subr.bf16.mxu0 0
    %1276 = vmatpush1.bf16.msra.mxu0 0
    %1277 = vmatprep.subr.bf16.mxu0 0
    %1278 = vmatpush1.bf16.msra.mxu0 0
    %1279 = vmatprep.subr.bf16.mxu0 0
    %1280 = vmatpush1.bf16.msra.mxu0 0
    %1281 = vmatprep.subr.bf16.mxu0 0
    %1282 = vmatpush1.bf16.msra.mxu0 0
    %1283 = vmatprep.subr.bf16.mxu0 0
    %1284 = vmatpush1.bf16.msra.mxu0 %v1035
    %1285 = vmatprep.subr.bf16.mxu0 0
    %1286 = vmatpush1.bf16.msra.mxu0 %v1034
    %1287 = vmatprep.subr.bf16.mxu0 0
    %1288 = vmatpush2.bf16.msra.mxu0 0
    %1289 = vmatprep.subr.bf16.mxu0 0
    %1290 = vmatpush2.bf16.msra.mxu0 0
    %1291 = vmatprep.subr.bf16.mxu0 0
    %1292 = vmatpush2.bf16.msra.mxu0 0
    %1293 = vmatprep.subr.bf16.mxu0 0
    %1294 = vmatpush2.bf16.msra.mxu0 0
    %1295 = vmatprep.subr.bf16.mxu0 0
    %1296 = vmatpush2.bf16.msra.mxu0 0
    %1297 = vmatprep.subr.bf16.mxu0 0
    %1298 = vmatpush2.bf16.msra.mxu0 0
    %1299 = vmatprep.subr.bf16.mxu0 0
    %1300 = vmatpush2.bf16.msra.mxu0 0
    %1301 = vmatprep.subr.bf16.mxu0 0
    %1302 = vmatpush2.bf16.msra.mxu0 0
    %1303 = vmatprep.mubr.bf16.mxu0 0
    %1304 = vmatmul.mubr.bf16.gmra.mxu0 %v1269
    %v1305 = vpop.f32.mrf.mxu0
    %v1306 = vadd.f32 0.0, %v1305
    %v1307 = vpop.f32.mrf.mxu0
    %v1308 = vpop.f32.mrf.mxu0
    %v1309 = vpop.f32.mrf.mxu0
    %1310 = vdwg.mxu0
    %v1312 = vrot.slane %v1306, 2
    %v1314 = vadd.f32 %v1105, %v1312
    %v1315 = vxor.u32 %v1314, 2147483648
    %v1316 = vmul.f32 %v1315, 1.442695
    %v1317 = vpow.pop %v1316
    %v1318 = vadd.f32 %v1317, 1.0
    %v1319 = vrcp.pop %v1318
    %v1320 = vmul.f32 1.0, %v1319
    %v1321 = vtanh.pop %v1314
    %v1323 = vrot.slane %v1256, 6
    %v1325 = vmul.f32 %v1320, %v1323
    %1327 = vrot.lane.b32.xlu0 %v1321, 64
    %v1328 = vpop.permute.xlu0 %1327
    %v1330 = vmul.f32 %v1320, %v1328
    %1332 = vrot.lane.b32.xlu0 %v1330, 32
    %v1333 = vpop.permute.xlu0 %1332
    %v1335 = vadd.f32 %v1325, %v1333
    %v1336 = vtanh.pop %v1335
    %1338 = vrot.lane.b32.xlu0 %v1336, 64
    %v1339 = vpop.permute.xlu0 %1338
    %v1341 = vmul.f32 %v1320, %v1339
    %v1343 = vrot.slane %v1012, 6
    %v1345 = vsel %vm170, %v1015, %v1343
    %v1346 = vpack.c.bf16 %v1341, %v1341
    %v1348 = vrot.slane %v1346, 3
    %1349 = vrot.lane.b32.xlu0 %v1348, 32
    %v1350 = vpop.permute.xlu0 %1349
    %v1352 = vsel %vm201, %v1350, 0
    %1354 = vmatprep.subr.bf16.mxu0 0
    %1355 = vmatpush1.bf16.msra.mxu0 0
    %1356 = vmatprep.subr.bf16.mxu0 0
    %1357 = vmatpush1.bf16.msra.mxu0 0
    %1358 = vmatprep.subr.bf16.mxu0 0
    %1359 = vmatpush1.bf16.msra.mxu0 0
    %1360 = vmatprep.subr.bf16.mxu0 0
    %1361 = vmatpush1.bf16.msra.mxu0 0
    %1362 = vmatprep.subr.bf16.mxu0 0
    %1363 = vmatpush1.bf16.msra.mxu0 0
    %1364 = vmatprep.subr.bf16.mxu0 0
    %1365 = vmatpush1.bf16.msra.mxu0 0
    %1366 = vmatprep.subr.bf16.mxu0 0
    %1367 = vmatpush1.bf16.msra.mxu0 %v1035
    %1368 = vmatprep.subr.bf16.mxu0 0
    %1369 = vmatpush1.bf16.msra.mxu0 %v1034
    %1370 = vmatprep.subr.bf16.mxu0 0
    %1371 = vmatpush2.bf16.msra.mxu0 0
    %1372 = vmatprep.subr.bf16.mxu0 0
    %1373 = vmatpush2.bf16.msra.mxu0 0
    %1374 = vmatprep.subr.bf16.mxu0 0
    %1375 = vmatpush2.bf16.msra.mxu0 0
    %1376 = vmatprep.subr.bf16.mxu0 0
    %1377 = vmatpush2.bf16.msra.mxu0 0
    %1378 = vmatprep.subr.bf16.mxu0 0
    %1379 = vmatpush2.bf16.msra.mxu0 0
    %1380 = vmatprep.subr.bf16.mxu0 0
    %1381 = vmatpush2.bf16.msra.mxu0 0
    %1382 = vmatprep.subr.bf16.mxu0 0
    %1383 = vmatpush2.bf16.msra.mxu0 0
    %1384 = vmatprep.subr.bf16.mxu0 0
    %1385 = vmatpush2.bf16.msra.mxu0 0
    %1386 = vmatprep.mubr.bf16.mxu0 0
    %1387 = vmatmul.mubr.bf16.gmra.mxu0 %v1352
    %v1388 = vpop.f32.mrf.mxu0
    %v1389 = vadd.f32 0.0, %v1388
    %v1390 = vpop.f32.mrf.mxu0
    %v1391 = vpop.f32.mrf.mxu0
    %v1392 = vpop.f32.mrf.mxu0
    %1393 = vdwg.mxu0
    %v1394 = vadd.f32 %v1345, %v1389
    %v1395 = vxor.u32 %v1394, 2147483648
    %v1396 = vmul.f32 %v1395, 1.442695
    %v1397 = vpow.pop %v1396
    %v1398 = vadd.f32 %v1397, 1.0
    %v1399 = vrcp.pop %v1398
    %v1400 = vmul.f32 1.0, %v1399
    %v1401 = vtanh.pop %v1394
    %v1403 = vrot.slane %v1335, 6
    %v1405 = vmul.f32 %v1400, %v1403
    %1407 = vrot.lane.b32.xlu0 %v1401, 64
    %v1408 = vpop.permute.xlu0 %1407
    %v1410 = vmul.f32 %v1400, %v1408
    %1412 = vrot.lane.b32.xlu0 %v1410, 32
    %v1413 = vpop.permute.xlu0 %1412
    %v1415 = vadd.f32 %v1405, %v1413
    %v1416 = vtanh.pop %v1415
    %1418 = vrot.lane.b32.xlu0 %v1416, 64
    %v1419 = vpop.permute.xlu0 %1418
    %v1421 = vmul.f32 %v1400, %v1419
    %v1422 = vrot.slane %v1012, 2
    %v1424 = vsel %vm170, %v1015, %v1422
    %v1425 = vpack.c.bf16 %v1421, %v1421
    %1427 = vrot.lane.b32.xlu0 %v1425, 32
    %v1428 = vpop.permute.xlu0 %1427
    %v1430 = vsel %vm201, %v1428, 0
    %1432 = vmatprep.subr.bf16.mxu0 0
    %1433 = vmatpush1.bf16.msra.mxu0 0
    %1434 = vmatprep.subr.bf16.mxu0 0
    %1435 = vmatpush1.bf16.msra.mxu0 0
    %1436 = vmatprep.subr.bf16.mxu0 0
    %1437 = vmatpush1.bf16.msra.mxu0 0
    %1438 = vmatprep.subr.bf16.mxu0 0
    %1439 = vmatpush1.bf16.msra.mxu0 0
    %1440 = vmatprep.subr.bf16.mxu0 0
    %1441 = vmatpush1.bf16.msra.mxu0 0
    %1442 = vmatprep.subr.bf16.mxu0 0
    %1443 = vmatpush1.bf16.msra.mxu0 0
    %1444 = vmatprep.subr.bf16.mxu0 0
    %1445 = vmatpush1.bf16.msra.mxu0 %v1035
    %1446 = vmatprep.subr.bf16.mxu0 0
    %1447 = vmatpush1.bf16.msra.mxu0 %v1034
    %1448 = vmatprep.subr.bf16.mxu0 0
    %1449 = vmatpush2.bf16.msra.mxu0 0
    %1450 = vmatprep.subr.bf16.mxu0 0
    %1451 = vmatpush2.bf16.msra.mxu0 0
    %1452 = vmatprep.subr.bf16.mxu0 0
    %1453 = vmatpush2.bf16.msra.mxu0 0
    %1454 = vmatprep.subr.bf16.mxu0 0
    %1455 = vmatpush2.bf16.msra.mxu0 0
    %1456 = vmatprep.subr.bf16.mxu0 0
    %1457 = vmatpush2.bf16.msra.mxu0 0
    %1458 = vmatprep.subr.bf16.mxu0 0
    %1459 = vmatpush2.bf16.msra.mxu0 0
    %1460 = vmatprep.subr.bf16.mxu0 0
    %1461 = vmatpush2.bf16.msra.mxu0 0
    %1462 = vmatprep.subr.bf16.mxu0 0
    %1463 = vmatpush2.bf16.msra.mxu0 0
    %1464 = vmatprep.mubr.bf16.mxu0 0
    %1465 = vmatmul.mubr.bf16.gmra.mxu0 %v1430
    %v1466 = vpop.f32.mrf.mxu0
    %v1467 = vadd.f32 0.0, %v1466
    %v1468 = vpop.f32.mrf.mxu0
    %v1469 = vpop.f32.mrf.mxu0
    %v1470 = vpop.f32.mrf.mxu0
    %1471 = vdwg.mxu0
    %v1473 = vrot.slane %v1467, 6
    %v1475 = vadd.f32 %v1424, %v1473
    %v1476 = vxor.u32 %v1475, 2147483648
    %v1477 = vmul.f32 %v1476, 1.442695
    %v1478 = vpow.pop %v1477
    %v1479 = vadd.f32 %v1478, 1.0
    %v1480 = vrcp.pop %v1479
    %v1481 = vmul.f32 1.0, %v1480
    %v1482 = vtanh.pop %v1475
    %v1484 = vrot.slane %v1415, 6
    %v1486 = vmul.f32 %v1481, %v1484
    %1488 = vrot.lane.b32.xlu0 %v1482, 64
    %v1489 = vpop.permute.xlu0 %1488
    %v1491 = vmul.f32 %v1481, %v1489
    %1493 = vrot.lane.b32.xlu0 %v1491, 32
    %v1494 = vpop.permute.xlu0 %1493
    %v1496 = vadd.f32 %v1486, %v1494
    %v1497 = vtanh.pop %v1496
    %1499 = vrot.lane.b32.xlu0 %v1497, 64
    %v1500 = vpop.permute.xlu0 %1499
    %v1502 = vmul.f32 %v1481, %v1500
    %v1503 = vpack.c.bf16 %v1502, %v1502
    %v1505 = vrot.slane %v1503, 1
    %1506 = vrot.lane.b32.xlu0 %v1505, 32
    %v1507 = vpop.permute.xlu0 %1506
    %v1509 = vsel %vm201, %v1507, 0
    %1511 = vmatprep.subr.bf16.mxu0 0
    %1512 = vmatpush1.bf16.msra.mxu0 0
    %1513 = vmatprep.subr.bf16.mxu0 0
    %1514 = vmatpush1.bf16.msra.mxu0 0
    %1515 = vmatprep.subr.bf16.mxu0 0
    %1516 = vmatpush1.bf16.msra.mxu0 0
    %1517 = vmatprep.subr.bf16.mxu0 0
    %1518 = vmatpush1.bf16.msra.mxu0 0
    %1519 = vmatprep.subr.bf16.mxu0 0
    %1520 = vmatpush1.bf16.msra.mxu0 0
    %1521 = vmatprep.subr.bf16.mxu0 0
    %1522 = vmatpush1.bf16.msra.mxu0 0
    %1523 = vmatprep.subr.bf16.mxu0 0
    %1524 = vmatpush1.bf16.msra.mxu0 %v1035
    %1525 = vmatprep.subr.bf16.mxu0 0
    %1526 = vmatpush1.bf16.msra.mxu0 %v1034
    %1527 = vmatprep.subr.bf16.mxu0 0
    %1528 = vmatpush2.bf16.msra.mxu0 0
    %1529 = vmatprep.subr.bf16.mxu0 0
    %1530 = vmatpush2.bf16.msra.mxu0 0
    %1531 = vmatprep.subr.bf16.mxu0 0
    %1532 = vmatpush2.bf16.msra.mxu0 0
    %1533 = vmatprep.subr.bf16.mxu0 0
    %1534 = vmatpush2.bf16.msra.mxu0 0
    %1535 = vmatprep.subr.bf16.mxu0 0
    %1536 = vmatpush2.bf16.msra.mxu0 0
    %1537 = vmatprep.subr.bf16.mxu0 0
    %1538 = vmatpush2.bf16.msra.mxu0 0
    %1539 = vmatprep.subr.bf16.mxu0 0
    %1540 = vmatpush2.bf16.msra.mxu0 0
    %1541 = vmatprep.subr.bf16.mxu0 0
    %1542 = vmatpush2.bf16.msra.mxu0 0
    %1543 = vmatprep.mubr.bf16.mxu0 0
    %1544 = vmatmul.mubr.bf16.gmra.mxu0 %v1509
    %v1545 = vpop.f32.mrf.mxu0
    %v1546 = vadd.f32 0.0, %v1545
    %v1547 = vpop.f32.mrf.mxu0
    %v1548 = vpop.f32.mrf.mxu0
    %v1549 = vpop.f32.mrf.mxu0
    %1550 = vdwg.mxu0
    %v1552 = vrot.slane %v1546, 4
    %v1554 = vadd.f32 %v1345, %v1552
    %v1555 = vxor.u32 %v1554, 2147483648
    %v1556 = vmul.f32 %v1555, 1.442695
    %v1557 = vpow.pop %v1556
    %v1558 = vadd.f32 %v1557, 1.0
    %v1559 = vrcp.pop %v1558
    %v1560 = vmul.f32 1.0, %v1559
    %v1561 = vtanh.pop %v1554
    %v1563 = vrot.slane %v1496, 6
    %v1565 = vmul.f32 %v1560, %v1563
    %1567 = vrot.lane.b32.xlu0 %v1561, 64
    %v1568 = vpop.permute.xlu0 %1567
    %v1570 = vmul.f32 %v1560, %v1568
    %1572 = vrot.lane.b32.xlu0 %v1570, 32
    %v1573 = vpop.permute.xlu0 %1572
    %v1575 = vadd.f32 %v1565, %v1573
    %v1576 = vtanh.pop %v1575
    %1578 = vrot.lane.b32.xlu0 %v1576, 64
    %v1579 = vpop.permute.xlu0 %1578
    %v1581 = vmul.f32 %v1560, %v1579
    %v1582 = vpack.c.bf16 %v1581, %v1581
    %v1584 = vrot.slane %v1582, 2
    %1585 = vrot.lane.b32.xlu0 %v1584, 32
    %v1586 = vpop.permute.xlu0 %1585
    %v1588 = vsel %vm201, %v1586, 0
    %1590 = vmatprep.subr.bf16.mxu0 0
    %1591 = vmatpush1.bf16.msra.mxu0 0
    %1592 = vmatprep.subr.bf16.mxu0 0
    %1593 = vmatpush1.bf16.msra.mxu0 0
    %1594 = vmatprep.subr.bf16.mxu0 0
    %1595 = vmatpush1.bf16.msra.mxu0 0
    %1596 = vmatprep.subr.bf16.mxu0 0
    %1597 = vmatpush1.bf16.msra.mxu0 0
    %1598 = vmatprep.subr.bf16.mxu0 0
    %1599 = vmatpush1.bf16.msra.mxu0 0
    %1600 = vmatprep.subr.bf16.mxu0 0
    %1601 = vmatpush1.bf16.msra.mxu0 0
    %1602 = vmatprep.subr.bf16.mxu0 0
    %1603 = vmatpush1.bf16.msra.mxu0 %v1035
    %1604 = vmatprep.subr.bf16.mxu0 0
    %1605 = vmatpush1.bf16.msra.mxu0 %v1034
    %1606 = vmatprep.subr.bf16.mxu0 0
    %1607 = vmatpush2.bf16.msra.mxu0 0
    %1608 = vmatprep.subr.bf16.mxu0 0
    %1609 = vmatpush2.bf16.msra.mxu0 0
    %1610 = vmatprep.subr.bf16.mxu0 0
    %1611 = vmatpush2.bf16.msra.mxu0 0
    %1612 = vmatprep.subr.bf16.mxu0 0
    %1613 = vmatpush2.bf16.msra.mxu0 0
    %1614 = vmatprep.subr.bf16.mxu0 0
    %1615 = vmatpush2.bf16.msra.mxu0 0
    %1616 = vmatprep.subr.bf16.mxu0 0
    %1617 = vmatpush2.bf16.msra.mxu0 0
    %1618 = vmatprep.subr.bf16.mxu0 0
    %1619 = vmatpush2.bf16.msra.mxu0 0
    %1620 = vmatprep.subr.bf16.mxu0 0
    %1621 = vmatpush2.bf16.msra.mxu0 0
    %1622 = vmatprep.mubr.bf16.mxu0 0
    %1623 = vmatmul.mubr.bf16.gmra.mxu0 %v1588
    %v1624 = vpop.f32.mrf.mxu0
    %v1625 = vadd.f32 0.0, %v1624
    %v1626 = vpop.f32.mrf.mxu0
    %v1627 = vpop.f32.mrf.mxu0
    %v1628 = vpop.f32.mrf.mxu0
    %1629 = vdwg.mxu0
    %v1631 = vrot.slane %v1625, 2
    %v1633 = vadd.f32 %v1424, %v1631
    %v1634 = vxor.u32 %v1633, 2147483648
    %v1635 = vmul.f32 %v1634, 1.442695
    %v1636 = vpow.pop %v1635
    %v1637 = vadd.f32 %v1636, 1.0
    %v1638 = vrcp.pop %v1637
    %v1639 = vmul.f32 1.0, %v1638
    %v1640 = vtanh.pop %v1633
    %v1642 = vrot.slane %v1575, 6
    %v1644 = vmul.f32 %v1639, %v1642
    %1646 = vrot.lane.b32.xlu0 %v1640, 64
    %v1647 = vpop.permute.xlu0 %1646
    %v1649 = vmul.f32 %v1639, %v1647
    %1651 = vrot.lane.b32.xlu0 %v1649, 32
    %v1652 = vpop.permute.xlu0 %1651
    %v1654 = vadd.f32 %v1644, %v1652
    %v1655 = vtanh.pop %v1654
    %1657 = vrot.lane.b32.xlu0 %v1655, 64
    %v1658 = vpop.permute.xlu0 %1657
    %v1660 = vmul.f32 %v1639, %v1658
    %v1662 = vrot.slane %v1183, 2
    %v1664 = vmax.f32 %v1102, %v1662
    %v1666 = vrot.slane %v1262, 4
    %v1668 = vmax.f32 %v1664, %v1666
    %v1670 = vrot.slane %v1341, 6
    %v1672 = vmax.f32 %v1668, %v1670
    %v1673 = vmax.f32 %v1672, %v1421
    %v1675 = vrot.slane %v1502, 2
    %v1677 = vmax.f32 %v1673, %v1675
    %v1679 = vrot.slane %v1581, 4
    %v1681 = vmax.f32 %v1677, %v1679
    %v1683 = vrot.slane %v1660, 6
    %v1685 = vmax.f32 %v1681, %v1683
    %v1686 = vpack.c.bf16 %v1685, %v1685
    %v1687 = vld [vmem:[#allocation14] sm:$0xf]
    %v1688 = vld [vmem:[#allocation14 + $0x4] sm:$0xf]
    %v1689 = vld [vmem:[#allocation14 + $0x8] sm:$0xf]
    %v1690 = vld [vmem:[#allocation14 + $0xc] sm:$0xf]
    %v1691 = vld [vmem:[#allocation16] sm:$0x1]
    %v1693 = vlaneseq
    %v1694 = vshrl.u32 %v1693, 7
    %v1695 = vsub.s32 0, %v1694
    %v1696 = vrot.slane %v1691, %v1695
    %1699 = vrot.lane.b32.xlu0 %v1686, 32
    %v1700 = vpop.permute.xlu0 %1699
    %v1705 = vunpack.c.l.b16 %v1687
    %v1706 = vunpack.c.l.b16 %v1688
    %v1707 = vunpack.c.l.b16 %v1689
    %v1708 = vunpack.c.l.b16 %v1690
    %v1709 = vpack.c.b16 %v1706, %v1705
    %v1710 = vpack.c.b16 %v1708, %v1707
    %v1714 = vsel %vm201, %v1700, 0
    %1716 = vmatprep.subr.bf16.mxu0 0
    %1717 = vmatpush1.bf16.msra.mxu0 0
    %1718 = vmatprep.subr.bf16.mxu0 0
    %1719 = vmatpush1.bf16.msra.mxu0 0
    %1720 = vmatprep.subr.bf16.mxu0 0
    %1721 = vmatpush1.bf16.msra.mxu0 0
    %1722 = vmatprep.subr.bf16.mxu0 0
    %1723 = vmatpush1.bf16.msra.mxu0 0
    %1724 = vmatprep.subr.bf16.mxu0 0
    %1725 = vmatpush1.bf16.msra.mxu0 0
    %1726 = vmatprep.subr.bf16.mxu0 0
    %1727 = vmatpush1.bf16.msra.mxu0 0
    %1728 = vmatprep.subr.bf16.mxu0 0
    %1729 = vmatpush1.bf16.msra.mxu0 %v1710
    %1730 = vmatprep.subr.bf16.mxu0 0
    %1731 = vmatpush1.bf16.msra.mxu0 %v1709
    %1732 = vmatprep.subr.bf16.mxu0 0
    %1733 = vmatpush2.bf16.msra.mxu0 0
    %1734 = vmatprep.subr.bf16.mxu0 0
    %1735 = vmatpush2.bf16.msra.mxu0 0
    %1736 = vmatprep.subr.bf16.mxu0 0
    %1737 = vmatpush2.bf16.msra.mxu0 0
    %1738 = vmatprep.subr.bf16.mxu0 0
    %1739 = vmatpush2.bf16.msra.mxu0 0
    %1740 = vmatprep.subr.bf16.mxu0 0
    %1741 = vmatpush2.bf16.msra.mxu0 0
    %1742 = vmatprep.subr.bf16.mxu0 0
    %1743 = vmatpush2.bf16.msra.mxu0 0
    %1744 = vmatprep.subr.bf16.mxu0 0
    %1745 = vmatpush2.bf16.msra.mxu0 0
    %1746 = vmatprep.subr.bf16.mxu0 0
    %1747 = vmatpush2.bf16.msra.mxu0 0
    %1748 = vmatprep.mubr.bf16.mxu0 0
    %1749 = vmatmul.mubr.bf16.gmra.mxu0 %v1714
    %v1750 = vpop.f32.mrf.mxu0
    %v1751 = vadd.f32 %v1696, %v1750
    %v1752 = vpop.f32.mrf.mxu0
    %v1753 = vpop.f32.mrf.mxu0
    %v1754 = vpop.f32.mrf.mxu0
    %1755 = vdwg.mxu0
    %v1756 = vmax.f32 %v1751, 0.0
    %v1757 = vpack.c.bf16 %v1756, %v1756
    %v1758 = vld [vmem:[%s9] sm:$0xf]
    %v1759 = vld [vmem:[%s9 + $0x4] sm:$0xf]
    %v1760 = vld [vmem:[%s9 + $0x8] sm:$0xf]
    %v1761 = vld [vmem:[%s9 + $0xc] sm:$0xf]
    %v1762 = vld [vmem:[%s10] sm:$0x1]
    %v1764 = vlaneseq
    %v1765 = vshrl.u32 %v1764, 7
    %v1766 = vsub.s32 0, %v1765
    %v1767 = vrot.slane %v1762, %v1766
    %v1773 = vunpack.c.l.b16 %v1758
    %v1774 = vunpack.c.l.b16 %v1759
    %v1775 = vunpack.c.l.b16 %v1760
    %v1776 = vunpack.c.l.b16 %v1761
    %v1777 = vpack.c.b16 %v1774, %v1773
    %v1778 = vpack.c.b16 %v1776, %v1775
    %v1782 = vsel %vm201, %v1757, 0
    %1784 = vmatprep.subr.bf16.mxu0 0
    %1785 = vmatpush1.bf16.msra.mxu0 0
    %1786 = vmatprep.subr.bf16.mxu0 0
    %1787 = vmatpush1.bf16.msra.mxu0 0
    %1788 = vmatprep.subr.bf16.mxu0 0
    %1789 = vmatpush1.bf16.msra.mxu0 0
    %1790 = vmatprep.subr.bf16.mxu0 0
    %1791 = vmatpush1.bf16.msra.mxu0 0
    %1792 = vmatprep.subr.bf16.mxu0 0
    %1793 = vmatpush1.bf16.msra.mxu0 0
    %1794 = vmatprep.subr.bf16.mxu0 0
    %1795 = vmatpush1.bf16.msra.mxu0 0
    %1796 = vmatprep.subr.bf16.mxu0 0
    %1797 = vmatpush1.bf16.msra.mxu0 %v1778
    %1798 = vmatprep.subr.bf16.mxu0 0
    %1799 = vmatpush1.bf16.msra.mxu0 %v1777
    %1800 = vmatprep.subr.bf16.mxu0 0
    %1801 = vmatpush2.bf16.msra.mxu0 0
    %1802 = vmatprep.subr.bf16.mxu0 0
    %1803 = vmatpush2.bf16.msra.mxu0 0
    %1804 = vmatprep.subr.bf16.mxu0 0
    %1805 = vmatpush2.bf16.msra.mxu0 0
    %1806 = vmatprep.subr.bf16.mxu0 0
    %1807 = vmatpush2.bf16.msra.mxu0 0
    %1808 = vmatprep.subr.bf16.mxu0 0
    %1809 = vmatpush2.bf16.msra.mxu0 0
    %1810 = vmatprep.subr.bf16.mxu0 0
    %1811 = vmatpush2.bf16.msra.mxu0 0
    %1812 = vmatprep.subr.bf16.mxu0 0
    %1813 = vmatpush2.bf16.msra.mxu0 0
    %1814 = vmatprep.subr.bf16.mxu0 0
    %1815 = vmatpush2.bf16.msra.mxu0 0
    %1816 = vmatprep.mubr.bf16.mxu0 0
    %1817 = vmatmul.mubr.bf16.gmra.mxu0 %v1782
    %v1818 = vpop.f32.mrf.mxu0
    %v1819 = vadd.f32 %v1767, %v1818
    %v1820 = vpop.f32.mrf.mxu0
    %v1821 = vpop.f32.mrf.mxu0
    %v1822 = vpop.f32.mrf.mxu0
    %1823 = vdwg.mxu0
    %1824 = vst [vmem:[#allocation17] sm:$0x3] %v1819
    // Predicated region
    $region82: #{tpu_custom_call.1} parent=1 // pred_check
      _
    $region83: #{tpu_custom_call.1} parent=1 // pred_check_branch
      %1826 = sbr.rel (0) target = $region85
    $region84: #{tpu_custom_call.1} parent=1 // pred_region
      %s1828 = ssub.s32 32, 32
      %1829 = vsyncadd [#allocation4], %s1828
      %s1831 = sshll.u32 [#allocation17], 4
      %s1832 = int_to_ptr.vmem [resolvable:$true] %s1831
      %1834 = dma.vmem_to_hbm [thread:$0]  %s1832, 32, %s11, [#allocation4]
    $region85: #{tpu_custom_call.1} parent=1 // pred_fallthru
      _
    // Predicated region
    $region86: #{tpu_custom_call.1} parent=1 // pred_check
      _
    $region87: #{tpu_custom_call.1} parent=1 // pred_check_branch
      %1836 = sbr.rel (0) target = $region89
    $region88: #{tpu_custom_call.1} parent=1 // pred_region
      %1837 = dma.done [#allocation4], 32
    $region89: #{tpu_custom_call.1} parent=1 // pred_fallthru
      _
    %1838 = vsyncpa [#allocation3], 1
    %1839 = vsyncpa [#allocation6], 1
    %1840 = vsyncpa [#allocation9], 1
    %1841 = vsyncpa [#allocation12], 1
    %1842 = vsyncpa [#allocation15], 1
    %1843 = vsyncpa [#allocation4], 1

</llo_original>
